<compile_context>
chip_gen: v6e
topology: v6e:2x2x1
jax: 0.10.0
libtpu: 0.0.40
codegen_flags: <defaults>
</compile_context>

<pallas_src>
import functools
import math

import jax
import jax.numpy as jnp
import numpy as np
from jax.experimental import pallas as pl
from jax.experimental.pallas import tpu as pltpu


# ----------------------------- Pallas kernel --------------------------------
def _cheb_kernel(x_ref, g_ref, w_ref, b_ref, o_ref, *, Ks: int, C_in: int):
    # x_ref : (N, TM*C_in)      activations for one M-tile, lanes = (m, c_in)
    # g_ref : (Ks, N, N)        precomputed Chebyshev polynomials T_k(gso)
    # w_ref : (Ks, C_in, C_out) weights (resident)
    # b_ref : (1, C_out)        bias (resident)
    # o_ref : (TM*N, C_out)     output rows ordered (m, n)
    TM = x_ref.shape[1] // C_in
    x = x_ref[...].astype(jnp.float32)                         # (N, TM*C_in)

    def regroup(z):
        # (N, TM*C_in) lanes (m, i) -> (TM*N, C_in) rows (m, n).
        # Pure VMEM lane-group -> sublane-block regrouping (no element transpose).
        if TM == 1:
            return z
        return jnp.concatenate(
            [z[:, m * C_in:(m + 1) * C_in] for m in range(TM)], axis=0)

    # k = 0: T_0(gso) = I  ->  skip the graph matmul entirely.
    acc = jnp.dot(regroup(x), w_ref[0].astype(jnp.float32),
                  preferred_element_type=jnp.float32)           # (TM*N, C_out)

    # k >= 1: each order is one large, *independent* MXU matmul (no recursion
    # dependency inside the kernel), followed by the fused weight matmul.
    for k in range(1, Ks):
        zk = jnp.dot(g_ref[k].astype(jnp.float32), x,
                     preferred_element_type=jnp.float32)        # (N, TM*C_in)
        acc = acc + jnp.dot(regroup(zk), w_ref[k].astype(jnp.float32),
                            preferred_element_type=jnp.float32)

    o_ref[...] = (acc + b_ref[...].astype(jnp.float32)).astype(o_ref.dtype)


# --------------------------- tile-size selection ------------------------------
def _pick_tile_m(M, N, C_in, C_out, itemsize=4,
                 budget_bytes=8 << 20, max_unroll=64):
    """Largest M-tile that (a) fits the VMEM working budget, (b) keeps the
    unrolled regroup small, (c) satisfies the (8,128) block constraints
    (or is the full axis, which is always a legal block)."""
    per_m = itemsize * N * (5 * C_in + 4 * C_out)   # x(2x)+zk+rows+acc+out(2x)
    lane = 128 // math.gcd(C_in, 128)               # (TM*C_in) % 128 == 0
    sub = max(1, 8 // math.gcd(N, 8))               # (TM*N)   % 8   == 0
    step = lane * sub // math.gcd(lane, sub)
    cap = min(M, max(1, budget_bytes // max(per_m, 1)), max_unroll)
    if cap >= M:
        return M                                    # full axis: always legal
    tm = max(step, (cap // step) * step)
    while tm >= step:
        if M % tm == 0:
            return tm
        tm -= step
    return M                                        # fallback: full axis


# --------------------- Chebyshev polynomials of the gso -----------------------
def _cheb_poly_stack(gso, Ks):
    """T_0 = I, T_1 = gso, T_k = 2*gso*T_{k-1} - T_{k-2}, stacked (Ks, N, N)."""
    N = gso.shape[0]
    mats = [jnp.eye(N, dtype=jnp.float32)]
    if Ks > 1:
        mats.append(gso.astype(jnp.float32))
    for _ in range(2, Ks):
        mats.append(2.0 * gso.astype(jnp.float32) @ mats[-1] - mats[-2])
    return jnp.stack(mats, axis=0)


# ------------------------------- wrapper -------------------------------------
@functools.partial(jax.jit, static_argnames=("tile_m",))
def cheb_graph_conv(x, gso, weight, bias=None, *, tile_m=None):
    """x: (B, C_in, T, N) float32.  Returns (B, T, N, C_out)."""
    B, C_in, T, N = x.shape
    Ks, _, C_out = weight.shape
    M = B * T
    TM = _pick_tile_m(M, N, C_in, C_out) if tile_m is None else tile_m
    assert M % TM == 0, (M, TM)

    # lane-dense input slab: xt[n, (b, t, c_in)]
    xt = jnp.transpose(x, (3, 0, 2, 1)).reshape(N, M * C_in)
    gpoly = _cheb_poly_stack(gso, Ks)                       # (Ks, N, N)
    bias2 = (jnp.zeros((1, C_out), x.dtype) if bias is None
             else bias.reshape(1, C_out))

    # Explicit VMEM budget; kept well under 64 MiB so v5e/v6e/v7x all accept it.
    est = 4 * (2 * N * TM * C_in            # x block (double buffered)
               + 2 * TM * N * C_out         # out block (double buffered)
               + 2 * N * TM * C_in          # zk + regrouped rows
               + TM * N * C_out             # f32 accumulator
               + 2 * (Ks * N * N + Ks * C_in * C_out + C_out))
    vmem_limit = int(min(max(2 * est, 16 << 20), 48 << 20))

    out = pl.pallas_call(
        functools.partial(_cheb_kernel, Ks=Ks, C_in=C_in),
        out_shape=jax.ShapeDtypeStruct((M * N, C_out), x.dtype),
        grid=(M // TM,),
        in_specs=[
            pl.BlockSpec((N, TM * C_in), lambda m: (0, m)),        # x M-tile
            pl.BlockSpec((Ks, N, N), lambda m: (0, 0, 0)),         # T_k(gso) resident
            pl.BlockSpec((Ks, C_in, C_out), lambda m: (0, 0, 0)),  # weight resident
            pl.BlockSpec((1, C_out), lambda m: (0, 0)),            # bias resident
        ],
        out_specs=pl.BlockSpec((TM * N, C_out), lambda m: (m, 0)),
        compiler_params=pltpu.CompilerParams(
            dimension_semantics=("parallel",),
            vmem_limit_bytes=vmem_limit,
        ),
    )(xt, gpoly, weight, bias2)

    # rows already ordered (b, t, n) -> free reshape, no extra HBM transpose
    return out.reshape(B, T, N, C_out)


# --------------------------- pure-JAX reference -------------------------------
def cheb_graph_conv_ref(x, gso, weight, bias):
    Ks = weight.shape[0]
    xp = jnp.transpose(x, (0, 2, 3, 1))
    x_list = [xp]
    if Ks > 1:
        x_list.append(jnp.einsum('hi,btij->bthj', gso, xp))
    for k in range(2, Ks):
        x_list.append(jnp.einsum('hi,btij->bthj', 2.0 * gso, x_list[k - 1])
                      - x_list[k - 2])
    xs = jnp.stack(x_list, axis=2)                      # (B,T,Ks,N,C_in)
    out = jnp.einsum('btkhi,kij->bthj', xs, weight)
    if bias is not None:
        out = out + bias
    return out


# --------------------------------- main ---------------------------------------
if __name__ == "__main__":
    B, C_in, T, N = 2, 4, 8, 16
    C_out, Ks = 32, 3

    key = jax.random.PRNGKey(0)
    kx, kg, kw, kb = jax.random.split(key, 4)

    # input activations, (B, C_in, T, N)
    x = jax.random.normal(kx, (B, C_in, T, N), dtype=jnp.float32)

    # deterministic synthetic graph shift operator (symmetric, scaled)
    a = jax.random.normal(kg, (N, N), dtype=jnp.float32)
    gso = (a + a.T) / (2.0 * jnp.sqrt(jnp.float32(N)))

    # kaiming_uniform_(a=sqrt(5)) equivalent for weight (Ks, c_in, c_out)
    fan_in = C_in * C_out
    gain = math.sqrt(2.0 / (1.0 + 5.0))
    w_bound = gain * math.sqrt(3.0 / fan_in)
    weight = jax.random.uniform(kw, (Ks, C_in, C_out), dtype=jnp.float32,
                                minval=-w_bound, maxval=w_bound)

    b_bound = 1.0 / math.sqrt(fan_in)
    bias = jax.random.uniform(kb, (C_out,), dtype=jnp.float32,
                              minval=-b_bound, maxval=b_bound)

    out = jax.block_until_ready(cheb_graph_conv(x, gso, weight, bias))
    ref = jax.block_until_ready(cheb_graph_conv_ref(x, gso, weight, bias))

    assert out.shape == (B, T, N, C_out), out.shape
    np.testing.assert_allclose(np.asarray(out), np.asarray(ref),
                               rtol=1e-4, atol=1e-5)
    print("KERNEL_OK")
</pallas_src>

<mosaic_0001>
module attributes {stable_mosaic.version = 11 : i64} {
  func.func @_cheb_kernel(%arg0: i32, %arg1: memref<16x64xf32, #tpu.memory_space<vmem>>, %arg2: memref<3x16x16xf32, #tpu.memory_space<vmem>>, %arg3: memref<3x4x32xf32, #tpu.memory_space<vmem>>, %arg4: memref<1x32xf32, #tpu.memory_space<vmem>>, %arg5: memref<256x32xf32, #tpu.memory_space<vmem>>) attributes {dimension_semantics = [#tpu.dimension_semantics<parallel>], iteration_bounds = array<i64: 1>, scalar_prefetch = 0 : i64, scratch_operands = 0 : i64, tpu.core_type = #tpu.core_type<tc>, window_params = [{transform_indices = @transform_0, window_bounds = array<i64: 16, 64>}, {pipeline_mode = #tpu.pipeline_mode<synchronous>, transform_indices = @transform_1, window_bounds = array<i64: 3, 16, 16>}, {pipeline_mode = #tpu.pipeline_mode<synchronous>, transform_indices = @transform_2, window_bounds = array<i64: 3, 4, 32>}, {pipeline_mode = #tpu.pipeline_mode<synchronous>, transform_indices = @transform_3, window_bounds = array<i64: 1, 32>}, {transform_indices = @transform_4, window_bounds = array<i64: 256, 32>}]} {
    %c0 = arith.constant 0 : index
    %c0_0 = arith.constant 0 : index
    %0 = vector.load %arg1[%c0, %c0_0] : memref<16x64xf32, #tpu.memory_space<vmem>>, vector<16x64xf32>
    %1 = vector.extract_strided_slice %0 {offsets = [0, 0], sizes = [16, 4], strides = [1, 1]} : vector<16x64xf32> to vector<16x4xf32>
    %2 = vector.extract_strided_slice %0 {offsets = [0, 4], sizes = [16, 4], strides = [1, 1]} : vector<16x64xf32> to vector<16x4xf32>
    %3 = vector.extract_strided_slice %0 {offsets = [0, 8], sizes = [16, 4], strides = [1, 1]} : vector<16x64xf32> to vector<16x4xf32>
    %4 = vector.extract_strided_slice %0 {offsets = [0, 12], sizes = [16, 4], strides = [1, 1]} : vector<16x64xf32> to vector<16x4xf32>
    %5 = vector.extract_strided_slice %0 {offsets = [0, 16], sizes = [16, 4], strides = [1, 1]} : vector<16x64xf32> to vector<16x4xf32>
    %6 = vector.extract_strided_slice %0 {offsets = [0, 20], sizes = [16, 4], strides = [1, 1]} : vector<16x64xf32> to vector<16x4xf32>
    %7 = vector.extract_strided_slice %0 {offsets = [0, 24], sizes = [16, 4], strides = [1, 1]} : vector<16x64xf32> to vector<16x4xf32>
    %8 = vector.extract_strided_slice %0 {offsets = [0, 28], sizes = [16, 4], strides = [1, 1]} : vector<16x64xf32> to vector<16x4xf32>
    %9 = vector.extract_strided_slice %0 {offsets = [0, 32], sizes = [16, 4], strides = [1, 1]} : vector<16x64xf32> to vector<16x4xf32>
    %10 = vector.extract_strided_slice %0 {offsets = [0, 36], sizes = [16, 4], strides = [1, 1]} : vector<16x64xf32> to vector<16x4xf32>
    %11 = vector.extract_strided_slice %0 {offsets = [0, 40], sizes = [16, 4], strides = [1, 1]} : vector<16x64xf32> to vector<16x4xf32>
    %12 = vector.extract_strided_slice %0 {offsets = [0, 44], sizes = [16, 4], strides = [1, 1]} : vector<16x64xf32> to vector<16x4xf32>
    %13 = vector.extract_strided_slice %0 {offsets = [0, 48], sizes = [16, 4], strides = [1, 1]} : vector<16x64xf32> to vector<16x4xf32>
    %14 = vector.extract_strided_slice %0 {offsets = [0, 52], sizes = [16, 4], strides = [1, 1]} : vector<16x64xf32> to vector<16x4xf32>
    %15 = vector.extract_strided_slice %0 {offsets = [0, 56], sizes = [16, 4], strides = [1, 1]} : vector<16x64xf32> to vector<16x4xf32>
    %16 = vector.extract_strided_slice %0 {offsets = [0, 60], sizes = [16, 4], strides = [1, 1]} : vector<16x64xf32> to vector<16x4xf32>
    %17 = tpu.concatenate %1, %2, %3, %4, %5, %6, %7, %8, %9, %10, %11, %12, %13, %14, %15, %16 in 0 : vector<16x4xf32>, vector<16x4xf32>, vector<16x4xf32>, vector<16x4xf32>, vector<16x4xf32>, vector<16x4xf32>, vector<16x4xf32>, vector<16x4xf32>, vector<16x4xf32>, vector<16x4xf32>, vector<16x4xf32>, vector<16x4xf32>, vector<16x4xf32>, vector<16x4xf32>, vector<16x4xf32>, vector<16x4xf32> -> vector<256x4xf32>
    %c0_1 = arith.constant 0 : index
    %c0_2 = arith.constant 0 : index
    %c0_3 = arith.constant 0 : index
    %18 = vector.load %arg3[%c0_1, %c0_2, %c0_3] : memref<3x4x32xf32, #tpu.memory_space<vmem>>, vector<1x4x32xf32>
    %19 = vector.shape_cast %18 : vector<1x4x32xf32> to vector<4x32xf32>
    %cst = arith.constant dense<0.000000e+00> : vector<256x32xf32>
    %20 = tpu.matmul %17, %19, %cst {dimension_numbers = #tpu.dot_dimension_numbers<[1], [0], [0], [1], [0, 0, 1, 1], [], []>} : vector<256x4xf32>, vector<4x32xf32>, vector<256x32xf32> -> vector<256x32xf32>
    %c1 = arith.constant 1 : index
    %c0_4 = arith.constant 0 : index
    %c0_5 = arith.constant 0 : index
    %21 = vector.load %arg2[%c1, %c0_4, %c0_5] : memref<3x16x16xf32, #tpu.memory_space<vmem>>, vector<1x16x16xf32>
    %22 = vector.shape_cast %21 : vector<1x16x16xf32> to vector<16x16xf32>
    %cst_6 = arith.constant dense<0.000000e+00> : vector<16x64xf32>
    %23 = tpu.matmul %22, %0, %cst_6 {dimension_numbers = #tpu.dot_dimension_numbers<[1], [0], [0], [1], [0, 0, 1, 1], [], []>} : vector<16x16xf32>, vector<16x64xf32>, vector<16x64xf32> -> vector<16x64xf32>
    %24 = vector.extract_strided_slice %23 {offsets = [0, 0], sizes = [16, 4], strides = [1, 1]} : vector<16x64xf32> to vector<16x4xf32>
    %25 = vector.extract_strided_slice %23 {offsets = [0, 4], sizes = [16, 4], strides = [1, 1]} : vector<16x64xf32> to vector<16x4xf32>
    %26 = vector.extract_strided_slice %23 {offsets = [0, 8], sizes = [16, 4], strides = [1, 1]} : vector<16x64xf32> to vector<16x4xf32>
    %27 = vector.extract_strided_slice %23 {offsets = [0, 12], sizes = [16, 4], strides = [1, 1]} : vector<16x64xf32> to vector<16x4xf32>
    %28 = vector.extract_strided_slice %23 {offsets = [0, 16], sizes = [16, 4], strides = [1, 1]} : vector<16x64xf32> to vector<16x4xf32>
    %29 = vector.extract_strided_slice %23 {offsets = [0, 20], sizes = [16, 4], strides = [1, 1]} : vector<16x64xf32> to vector<16x4xf32>
    %30 = vector.extract_strided_slice %23 {offsets = [0, 24], sizes = [16, 4], strides = [1, 1]} : vector<16x64xf32> to vector<16x4xf32>
    %31 = vector.extract_strided_slice %23 {offsets = [0, 28], sizes = [16, 4], strides = [1, 1]} : vector<16x64xf32> to vector<16x4xf32>
    %32 = vector.extract_strided_slice %23 {offsets = [0, 32], sizes = [16, 4], strides = [1, 1]} : vector<16x64xf32> to vector<16x4xf32>
    %33 = vector.extract_strided_slice %23 {offsets = [0, 36], sizes = [16, 4], strides = [1, 1]} : vector<16x64xf32> to vector<16x4xf32>
    %34 = vector.extract_strided_slice %23 {offsets = [0, 40], sizes = [16, 4], strides = [1, 1]} : vector<16x64xf32> to vector<16x4xf32>
    %35 = vector.extract_strided_slice %23 {offsets = [0, 44], sizes = [16, 4], strides = [1, 1]} : vector<16x64xf32> to vector<16x4xf32>
    %36 = vector.extract_strided_slice %23 {offsets = [0, 48], sizes = [16, 4], strides = [1, 1]} : vector<16x64xf32> to vector<16x4xf32>
    %37 = vector.extract_strided_slice %23 {offsets = [0, 52], sizes = [16, 4], strides = [1, 1]} : vector<16x64xf32> to vector<16x4xf32>
    %38 = vector.extract_strided_slice %23 {offsets = [0, 56], sizes = [16, 4], strides = [1, 1]} : vector<16x64xf32> to vector<16x4xf32>
    %39 = vector.extract_strided_slice %23 {offsets = [0, 60], sizes = [16, 4], strides = [1, 1]} : vector<16x64xf32> to vector<16x4xf32>
    %40 = tpu.concatenate %24, %25, %26, %27, %28, %29, %30, %31, %32, %33, %34, %35, %36, %37, %38, %39 in 0 : vector<16x4xf32>, vector<16x4xf32>, vector<16x4xf32>, vector<16x4xf32>, vector<16x4xf32>, vector<16x4xf32>, vector<16x4xf32>, vector<16x4xf32>, vector<16x4xf32>, vector<16x4xf32>, vector<16x4xf32>, vector<16x4xf32>, vector<16x4xf32>, vector<16x4xf32>, vector<16x4xf32>, vector<16x4xf32> -> vector<256x4xf32>
    %c1_7 = arith.constant 1 : index
    %c0_8 = arith.constant 0 : index
    %c0_9 = arith.constant 0 : index
    %41 = vector.load %arg3[%c1_7, %c0_8, %c0_9] : memref<3x4x32xf32, #tpu.memory_space<vmem>>, vector<1x4x32xf32>
    %42 = vector.shape_cast %41 : vector<1x4x32xf32> to vector<4x32xf32>
    %cst_10 = arith.constant dense<0.000000e+00> : vector<256x32xf32>
    %43 = tpu.matmul %40, %42, %cst_10 {dimension_numbers = #tpu.dot_dimension_numbers<[1], [0], [0], [1], [0, 0, 1, 1], [], []>} : vector<256x4xf32>, vector<4x32xf32>, vector<256x32xf32> -> vector<256x32xf32>
    %44 = arith.addf %20, %43 : vector<256x32xf32>
    %c2 = arith.constant 2 : index
    %c0_11 = arith.constant 0 : index
    %c0_12 = arith.constant 0 : index
    %45 = vector.load %arg2[%c2, %c0_11, %c0_12] : memref<3x16x16xf32, #tpu.memory_space<vmem>>, vector<1x16x16xf32>
    %46 = vector.shape_cast %45 : vector<1x16x16xf32> to vector<16x16xf32>
    %cst_13 = arith.constant dense<0.000000e+00> : vector<16x64xf32>
    %47 = tpu.matmul %46, %0, %cst_13 {dimension_numbers = #tpu.dot_dimension_numbers<[1], [0], [0], [1], [0, 0, 1, 1], [], []>} : vector<16x16xf32>, vector<16x64xf32>, vector<16x64xf32> -> vector<16x64xf32>
    %48 = vector.extract_strided_slice %47 {offsets = [0, 0], sizes = [16, 4], strides = [1, 1]} : vector<16x64xf32> to vector<16x4xf32>
    %49 = vector.extract_strided_slice %47 {offsets = [0, 4], sizes = [16, 4], strides = [1, 1]} : vector<16x64xf32> to vector<16x4xf32>
    %50 = vector.extract_strided_slice %47 {offsets = [0, 8], sizes = [16, 4], strides = [1, 1]} : vector<16x64xf32> to vector<16x4xf32>
    %51 = vector.extract_strided_slice %47 {offsets = [0, 12], sizes = [16, 4], strides = [1, 1]} : vector<16x64xf32> to vector<16x4xf32>
    %52 = vector.extract_strided_slice %47 {offsets = [0, 16], sizes = [16, 4], strides = [1, 1]} : vector<16x64xf32> to vector<16x4xf32>
    %53 = vector.extract_strided_slice %47 {offsets = [0, 20], sizes = [16, 4], strides = [1, 1]} : vector<16x64xf32> to vector<16x4xf32>
    %54 = vector.extract_strided_slice %47 {offsets = [0, 24], sizes = [16, 4], strides = [1, 1]} : vector<16x64xf32> to vector<16x4xf32>
    %55 = vector.extract_strided_slice %47 {offsets = [0, 28], sizes = [16, 4], strides = [1, 1]} : vector<16x64xf32> to vector<16x4xf32>
    %56 = vector.extract_strided_slice %47 {offsets = [0, 32], sizes = [16, 4], strides = [1, 1]} : vector<16x64xf32> to vector<16x4xf32>
    %57 = vector.extract_strided_slice %47 {offsets = [0, 36], sizes = [16, 4], strides = [1, 1]} : vector<16x64xf32> to vector<16x4xf32>
    %58 = vector.extract_strided_slice %47 {offsets = [0, 40], sizes = [16, 4], strides = [1, 1]} : vector<16x64xf32> to vector<16x4xf32>
    %59 = vector.extract_strided_slice %47 {offsets = [0, 44], sizes = [16, 4], strides = [1, 1]} : vector<16x64xf32> to vector<16x4xf32>
    %60 = vector.extract_strided_slice %47 {offsets = [0, 48], sizes = [16, 4], strides = [1, 1]} : vector<16x64xf32> to vector<16x4xf32>
    %61 = vector.extract_strided_slice %47 {offsets = [0, 52], sizes = [16, 4], strides = [1, 1]} : vector<16x64xf32> to vector<16x4xf32>
    %62 = vector.extract_strided_slice %47 {offsets = [0, 56], sizes = [16, 4], strides = [1, 1]} : vector<16x64xf32> to vector<16x4xf32>
    %63 = vector.extract_strided_slice %47 {offsets = [0, 60], sizes = [16, 4], strides = [1, 1]} : vector<16x64xf32> to vector<16x4xf32>
    %64 = tpu.concatenate %48, %49, %50, %51, %52, %53, %54, %55, %56, %57, %58, %59, %60, %61, %62, %63 in 0 : vector<16x4xf32>, vector<16x4xf32>, vector<16x4xf32>, vector<16x4xf32>, vector<16x4xf32>, vector<16x4xf32>, vector<16x4xf32>, vector<16x4xf32>, vector<16x4xf32>, vector<16x4xf32>, vector<16x4xf32>, vector<16x4xf32>, vector<16x4xf32>, vector<16x4xf32>, vector<16x4xf32>, vector<16x4xf32> -> vector<256x4xf32>
    %c2_14 = arith.constant 2 : index
    %c0_15 = arith.constant 0 : index
    %c0_16 = arith.constant 0 : index
    %65 = vector.load %arg3[%c2_14, %c0_15, %c0_16] : memref<3x4x32xf32, #tpu.memory_space<vmem>>, vector<1x4x32xf32>
    %66 = vector.shape_cast %65 : vector<1x4x32xf32> to vector<4x32xf32>
    %cst_17 = arith.constant dense<0.000000e+00> : vector<256x32xf32>
    %67 = tpu.matmul %64, %66, %cst_17 {dimension_numbers = #tpu.dot_dimension_numbers<[1], [0], [0], [1], [0, 0, 1, 1], [], []>} : vector<256x4xf32>, vector<4x32xf32>, vector<256x32xf32> -> vector<256x32xf32>
    %68 = arith.addf %44, %67 : vector<256x32xf32>
    %c0_18 = arith.constant 0 : index
    %c0_19 = arith.constant 0 : index
    %69 = vector.load %arg4[%c0_18, %c0_19] : memref<1x32xf32, #tpu.memory_space<vmem>>, vector<1x32xf32>
    %70 = vector.broadcast %69 : vector<1x32xf32> to vector<256x32xf32>
    %71 = arith.addf %68, %70 : vector<256x32xf32>
    %c0_20 = arith.constant 0 : index
    %c0_21 = arith.constant 0 : index
    %72 = vector.load %arg5[%c0_20, %c0_21] : memref<256x32xf32, #tpu.memory_space<vmem>>, vector<256x32xf32>
    tpu.vector_store %arg5[%c0_20, %c0_21], %71 {strides = array<i32>} : memref<256x32xf32, #tpu.memory_space<vmem>>, vector<256x32xf32>,
    return
  }
  func.func @transform_0(%arg0: i32) -> (i32, i32) {
    %c0_i32 = arith.constant 0 : i32
    %c0_i32_0 = arith.constant 0 : i32
    return %c0_i32, %arg0 : i32, i32
  }
  func.func @transform_1(%arg0: i32) -> (i32, i32, i32) {
    %c0_i32 = arith.constant 0 : i32
    %c0_i32_0 = arith.constant 0 : i32
    %c0_i32_1 = arith.constant 0 : i32
    %c0_i32_2 = arith.constant 0 : i32
    return %c0_i32, %c0_i32_0, %c0_i32_1 : i32, i32, i32
  }
  func.func @transform_2(%arg0: i32) -> (i32, i32, i32) {
    %c0_i32 = arith.constant 0 : i32
    %c0_i32_0 = arith.constant 0 : i32
    %c0_i32_1 = arith.constant 0 : i32
    %c0_i32_2 = arith.constant 0 : i32
    return %c0_i32, %c0_i32_0, %c0_i32_1 : i32, i32, i32
  }
  func.func @transform_3(%arg0: i32) -> (i32, i32) {
    %c0_i32 = arith.constant 0 : i32
    %c0_i32_0 = arith.constant 0 : i32
    %c0_i32_1 = arith.constant 0 : i32
    return %c0_i32, %c0_i32_0 : i32, i32
  }
  func.func @transform_4(%arg0: i32) -> (i32, i32) {
    %c0_i32 = arith.constant 0 : i32
    %c0_i32_0 = arith.constant 0 : i32
    return %arg0, %c0_i32 : i32, i32
  }
}

</mosaic_0001>

<llo_original>
// kernel: cheb_graph_conv.1
$region0: #{cheb_graph_conv.1}
  #allocation0 [shape = 'u32[]', space=smem, size = 0x4, offset = 0x4, fixed_abs, tag = 'smem constant byte address 0x4 - core index']
  #allocation1 [shape = 'u32[144,128]{1,0:T(1,128)}', space=vmem, size = 0x12000, scoped, tag = 'internal scratch']
  %s0 = inlined_call_operand.vmem [shape: f32[16,64], index: 0, kind: input, shape index: {}]
  %s1 = inlined_call_operand.vmem [shape: f32[3,16,16], index: 1, kind: input, shape index: {}]
  %s2 = inlined_call_operand.vmem [shape: f32[3,4,32], index: 2, kind: input, shape index: {}]
  %s3 = inlined_call_operand.vmem [shape: f32[1,32], index: 3, kind: input, shape index: {}]
  %s4 = inlined_call_operand.hbm [shape: f32[256,32], index: 4, kind: output, shape index: {}]
  %s5 = sld [smem:[#allocation0]]
  $region26: #{cheb_graph_conv.1} parent=0
    _
  %s7 = ssub.s32 1, %s5
  %s8 = scalar_select 0, %s7, %s5
  $region1: #{cheb_graph_conv.1} parent=0
    #allocation2 [shape = 'u8[131072]{0}', space=vmem, size = 0x20000, scoped, tag = 'output window, operand 0, single buffered']
    #allocation3 [shape = 's32[1]{0}', space=sflag, size = 0x4, scoped, tag = 'scoped memory for cheb_graph_conv.1']
    %9 = vsyncpa [#allocation3], 0
    // Predicated region
    $region2: #{cheb_graph_conv.1} parent=1 // pred_check
      _
    $region3: #{cheb_graph_conv.1} parent=1 // pred_check_branch
      %11 = sbr.rel (0) target = $region5
    $region4: #{cheb_graph_conv.1} parent=1 // pred_region
      _
    $region5: #{cheb_graph_conv.1} parent=1 // pred_fallthru
      _
    // Predicated region
    $region6: #{cheb_graph_conv.1} parent=1 // pred_check
      _
    $region7: #{cheb_graph_conv.1} parent=1 // pred_check_branch
      %13 = sbr.rel (0) target = $region9
    $region8: #{cheb_graph_conv.1} parent=1 // pred_region
      _
    $region9: #{cheb_graph_conv.1} parent=1 // pred_fallthru
      _
    // Predicated region
    $region10: #{cheb_graph_conv.1} parent=1 // pred_check
      _
    $region11: #{cheb_graph_conv.1} parent=1 // pred_check_branch
      %15 = sbr.rel (0) target = $region13
    $region12: #{cheb_graph_conv.1} parent=1 // pred_region
      _
    $region13: #{cheb_graph_conv.1} parent=1 // pred_fallthru
      _
    // Predicated region
    $region14: #{cheb_graph_conv.1} parent=1 // pred_check
      _
    $region15: #{cheb_graph_conv.1} parent=1 // pred_check_branch
      %17 = sbr.rel (0) target = $region17
    $region16: #{cheb_graph_conv.1} parent=1 // pred_region
      _
    $region17: #{cheb_graph_conv.1} parent=1 // pred_fallthru
      _
    %v18 = vld [vmem:[%s0] sm:$0xff]
    %v19 = vld [vmem:[%s0 + $0x8] sm:$0xff]
    %22 = vrot.lane.b32.xlu0 %v18, 124
    %v23 = vpop.permute.xlu0 %22
    %24 = vrot.lane.b32.xlu0 %v19, 124
    %v25 = vpop.permute.xlu0 %24
    %26 = vrot.lane.b32.xlu0 %v18, 120
    %v27 = vpop.permute.xlu0 %26
    %28 = vrot.lane.b32.xlu0 %v19, 120
    %v29 = vpop.permute.xlu0 %28
    %30 = vrot.lane.b32.xlu0 %v18, 116
    %v31 = vpop.permute.xlu0 %30
    %32 = vrot.lane.b32.xlu0 %v19, 116
    %v33 = vpop.permute.xlu0 %32
    %34 = vrot.lane.b32.xlu0 %v18, 112
    %v35 = vpop.permute.xlu0 %34
    %36 = vrot.lane.b32.xlu0 %v19, 112
    %v37 = vpop.permute.xlu0 %36
    %38 = vrot.lane.b32.xlu0 %v18, 108
    %v39 = vpop.permute.xlu0 %38
    %40 = vrot.lane.b32.xlu0 %v19, 108
    %v41 = vpop.permute.xlu0 %40
    %42 = vrot.lane.b32.xlu0 %v18, 104
    %v43 = vpop.permute.xlu0 %42
    %44 = vrot.lane.b32.xlu0 %v19, 104
    %v45 = vpop.permute.xlu0 %44
    %46 = vrot.lane.b32.xlu0 %v18, 100
    %v47 = vpop.permute.xlu0 %46
    %48 = vrot.lane.b32.xlu0 %v19, 100
    %v49 = vpop.permute.xlu0 %48
    %50 = vrot.lane.b32.xlu0 %v18, 96
    %v51 = vpop.permute.xlu0 %50
    %52 = vrot.lane.b32.xlu0 %v19, 96
    %v53 = vpop.permute.xlu0 %52
    %54 = vrot.lane.b32.xlu0 %v18, 92
    %v55 = vpop.permute.xlu0 %54
    %56 = vrot.lane.b32.xlu0 %v19, 92
    %v57 = vpop.permute.xlu0 %56
    %58 = vrot.lane.b32.xlu0 %v18, 88
    %v59 = vpop.permute.xlu0 %58
    %60 = vrot.lane.b32.xlu0 %v19, 88
    %v61 = vpop.permute.xlu0 %60
    %62 = vrot.lane.b32.xlu0 %v18, 84
    %v63 = vpop.permute.xlu0 %62
    %64 = vrot.lane.b32.xlu0 %v19, 84
    %v65 = vpop.permute.xlu0 %64
    %66 = vrot.lane.b32.xlu0 %v18, 80
    %v67 = vpop.permute.xlu0 %66
    %68 = vrot.lane.b32.xlu0 %v19, 80
    %v69 = vpop.permute.xlu0 %68
    %70 = vrot.lane.b32.xlu0 %v18, 76
    %v71 = vpop.permute.xlu0 %70
    %72 = vrot.lane.b32.xlu0 %v19, 76
    %v73 = vpop.permute.xlu0 %72
    %74 = vrot.lane.b32.xlu0 %v18, 72
    %v75 = vpop.permute.xlu0 %74
    %76 = vrot.lane.b32.xlu0 %v19, 72
    %v77 = vpop.permute.xlu0 %76
    %78 = vrot.lane.b32.xlu0 %v18, 68
    %v79 = vpop.permute.xlu0 %78
    %80 = vrot.lane.b32.xlu0 %v19, 68
    %v81 = vpop.permute.xlu0 %80
    %v82 = vld [vmem:[%s2] sm:$0xf]
    %s83 = scalar_lea.vmem %s1, 16
    %v84 = vld [vmem:[%s83] sm:$0xff]
    %v85 = vld [vmem:[%s83 + $0x8] sm:$0xff]
    %vm86 = vcmask 130048
    %v88 = vsel %vm86, %v84, 0
    %v91 = vsel %vm86, %v85, 0
    %93 = vmatprep.subr.mxu0 0.0
    %94 = vmatpush1.msra.mxu0 0.0
    %95 = vmatprep.subr.mxu0 0.0
    %96 = vmatpush1.msra.mxu0 0.0
    %97 = vmatprep.subr.mxu0 0.0
    %98 = vmatpush1.msra.mxu0 0.0
    %99 = vmatprep.subr.mxu0 0.0
    %100 = vmatpush1.msra.mxu0 0.0
    %101 = vmatprep.subr.mxu0 0.0
    %102 = vmatpush1.msra.mxu0 0.0
    %103 = vmatprep.subr.mxu0 0.0
    %104 = vmatpush1.msra.mxu0 0.0
    %105 = vmatprep.subr.mxu0 0.0
    %106 = vmatpush1.msra.mxu0 0.0
    %107 = vmatprep.subr.mxu0 0.0
    %108 = vmatpush1.msra.mxu0 0.0
    %109 = vmatprep.subr.mxu0 0.0
    %110 = vmatpush1.msra.mxu0 0.0
    %111 = vmatprep.subr.mxu0 0.0
    %112 = vmatpush1.msra.mxu0 0.0
    %113 = vmatprep.subr.mxu0 0.0
    %114 = vmatpush1.msra.mxu0 0.0
    %115 = vmatprep.subr.mxu0 0.0
    %116 = vmatpush1.msra.mxu0 0.0
    %117 = vmatprep.subr.mxu0 0.0
    %118 = vmatpush1.msra.mxu0 0.0
    %119 = vmatprep.subr.mxu0 0.0
    %120 = vmatpush1.msra.mxu0 0.0
    %121 = vmatprep.subr.mxu0 0.0
    %122 = vmatpush1.msra.mxu0 %v19
    %123 = vmatprep.subr.mxu0 0.0
    %124 = vmatpush1.msra.mxu0 %v18
    %125 = vmatprep.subr.mxu0 0.0
    %126 = vmatpush2.msra.mxu0 0.0
    %127 = vmatprep.subr.mxu0 0.0
    %128 = vmatpush2.msra.mxu0 0.0
    %129 = vmatprep.subr.mxu0 0.0
    %130 = vmatpush2.msra.mxu0 0.0
    %131 = vmatprep.subr.mxu0 0.0
    %132 = vmatpush2.msra.mxu0 0.0
    %133 = vmatprep.subr.mxu0 0.0
    %134 = vmatpush2.msra.mxu0 0.0
    %135 = vmatprep.subr.mxu0 0.0
    %136 = vmatpush2.msra.mxu0 0.0
    %137 = vmatprep.subr.mxu0 0.0
    %138 = vmatpush2.msra.mxu0 0.0
    %139 = vmatprep.subr.mxu0 0.0
    %140 = vmatpush2.msra.mxu0 0.0
    %141 = vmatprep.subr.mxu0 0.0
    %142 = vmatpush2.msra.mxu0 0.0
    %143 = vmatprep.subr.mxu0 0.0
    %144 = vmatpush2.msra.mxu0 0.0
    %145 = vmatprep.subr.mxu0 0.0
    %146 = vmatpush2.msra.mxu0 0.0
    %147 = vmatprep.subr.mxu0 0.0
    %148 = vmatpush2.msra.mxu0 0.0
    %149 = vmatprep.subr.mxu0 0.0
    %150 = vmatpush2.msra.mxu0 0.0
    %151 = vmatprep.subr.mxu0 0.0
    %152 = vmatpush2.msra.mxu0 0.0
    %153 = vmatprep.subr.mxu0 0.0
    %154 = vmatpush2.msra.mxu0 0.0
    %155 = vmatprep.subr.mxu0 0.0
    %156 = vmatpush2.msra.mxu0 0.0
    %157 = vmatprep.mubr.f32.mxu0 0.0
    %158 = vmatmul.mubr.f32.gmra.mxu0 %v88
    %v159 = vpop.f32.mrf.mxu0
    %v160 = vadd.f32 0.0, %v159
    %v161 = vpop.f32.mrf.mxu0
    %162 = vmatprep.mubr.f32.mxu0 0.0
    %163 = vmatmul.mubr.f32.gmra.mxu0 %v91
    %v164 = vpop.f32.mrf.mxu0
    %v165 = vadd.f32 0.0, %v164
    %v166 = vpop.f32.mrf.mxu0
    %167 = vdwg.mxu0
    %170 = vrot.lane.b32.xlu0 %v160, 124
    %v171 = vpop.permute.xlu0 %170
    %172 = vrot.lane.b32.xlu0 %v165, 124
    %v173 = vpop.permute.xlu0 %172
    %174 = vrot.lane.b32.xlu0 %v160, 120
    %v175 = vpop.permute.xlu0 %174
    %176 = vrot.lane.b32.xlu0 %v165, 120
    %v177 = vpop.permute.xlu0 %176
    %178 = vrot.lane.b32.xlu0 %v160, 116
    %v179 = vpop.permute.xlu0 %178
    %180 = vrot.lane.b32.xlu0 %v165, 116
    %v181 = vpop.permute.xlu0 %180
    %182 = vrot.lane.b32.xlu0 %v160, 112
    %v183 = vpop.permute.xlu0 %182
    %184 = vrot.lane.b32.xlu0 %v165, 112
    %v185 = vpop.permute.xlu0 %184
    %186 = vrot.lane.b32.xlu0 %v160, 108
    %v187 = vpop.permute.xlu0 %186
    %188 = vrot.lane.b32.xlu0 %v165, 108
    %v189 = vpop.permute.xlu0 %188
    %190 = vrot.lane.b32.xlu0 %v160, 104
    %v191 = vpop.permute.xlu0 %190
    %192 = vrot.lane.b32.xlu0 %v165, 104
    %v193 = vpop.permute.xlu0 %192
    %194 = vrot.lane.b32.xlu0 %v160, 100
    %v195 = vpop.permute.xlu0 %194
    %196 = vrot.lane.b32.xlu0 %v165, 100
    %v197 = vpop.permute.xlu0 %196
    %198 = vrot.lane.b32.xlu0 %v160, 96
    %v199 = vpop.permute.xlu0 %198
    %200 = vrot.lane.b32.xlu0 %v165, 96
    %v201 = vpop.permute.xlu0 %200
    %202 = vrot.lane.b32.xlu0 %v160, 92
    %v203 = vpop.permute.xlu0 %202
    %204 = vrot.lane.b32.xlu0 %v165, 92
    %v205 = vpop.permute.xlu0 %204
    %206 = vrot.lane.b32.xlu0 %v160, 88
    %v207 = vpop.permute.xlu0 %206
    %208 = vrot.lane.b32.xlu0 %v165, 88
    %v209 = vpop.permute.xlu0 %208
    %210 = vrot.lane.b32.xlu0 %v160, 84
    %v211 = vpop.permute.xlu0 %210
    %212 = vrot.lane.b32.xlu0 %v165, 84
    %v213 = vpop.permute.xlu0 %212
    %214 = vrot.lane.b32.xlu0 %v160, 80
    %v215 = vpop.permute.xlu0 %214
    %216 = vrot.lane.b32.xlu0 %v165, 80
    %v217 = vpop.permute.xlu0 %216
    %218 = vrot.lane.b32.xlu0 %v160, 76
    %v219 = vpop.permute.xlu0 %218
    %220 = vrot.lane.b32.xlu0 %v165, 76
    %v221 = vpop.permute.xlu0 %220
    %222 = vrot.lane.b32.xlu0 %v160, 72
    %v223 = vpop.permute.xlu0 %222
    %224 = vrot.lane.b32.xlu0 %v165, 72
    %v225 = vpop.permute.xlu0 %224
    %226 = vrot.lane.b32.xlu0 %v160, 68
    %v227 = vpop.permute.xlu0 %226
    %228 = vrot.lane.b32.xlu0 %v165, 68
    %v229 = vpop.permute.xlu0 %228
    %s230 = scalar_lea.vmem %s2, 4
    %v231 = vld [vmem:[%s230] sm:$0xf]
    %vm232 = vcmask 31744
    %v233 = vsel %vm232, %v160, 0
    %v235 = vsel %vm232, %v165, 0
    %v237 = vsel %vm232, %v171, 0
    %v239 = vsel %vm232, %v173, 0
    %v241 = vsel %vm232, %v175, 0
    %v243 = vsel %vm232, %v177, 0
    %v245 = vsel %vm232, %v179, 0
    %v247 = vsel %vm232, %v181, 0
    %v249 = vsel %vm232, %v183, 0
    %v251 = vsel %vm232, %v185, 0
    %v253 = vsel %vm232, %v187, 0
    %v255 = vsel %vm232, %v189, 0
    %v257 = vsel %vm232, %v191, 0
    %v259 = vsel %vm232, %v193, 0
    %v261 = vsel %vm232, %v195, 0
    %v263 = vsel %vm232, %v197, 0
    %v265 = vsel %vm232, %v199, 0
    %v267 = vsel %vm232, %v201, 0
    %v269 = vsel %vm232, %v203, 0
    %v271 = vsel %vm232, %v205, 0
    %v273 = vsel %vm232, %v207, 0
    %v275 = vsel %vm232, %v209, 0
    %v277 = vsel %vm232, %v211, 0
    %v279 = vsel %vm232, %v213, 0
    %v281 = vsel %vm232, %v215, 0
    %v283 = vsel %vm232, %v217, 0
    %v285 = vsel %vm232, %v219, 0
    %v287 = vsel %vm232, %v221, 0
    %v289 = vsel %vm232, %v223, 0
    %v291 = vsel %vm232, %v225, 0
    %v293 = vsel %vm232, %v227, 0
    %v295 = vsel %vm232, %v229, 0
    %vm297 = vcmask 1043456
    %v299 = vsel %vm297, %v231, 0
    %301 = vmatprep.subr.mxu0 0.0
    %302 = vmatpush1.msra.mxu0 0.0
    %303 = vmatprep.subr.mxu0 0.0
    %304 = vmatpush1.msra.mxu0 0.0
    %305 = vmatprep.subr.mxu0 0.0
    %306 = vmatpush1.msra.mxu0 0.0
    %307 = vmatprep.subr.mxu0 0.0
    %308 = vmatpush1.msra.mxu0 0.0
    %309 = vmatprep.subr.mxu0 0.0
    %310 = vmatpush1.msra.mxu0 0.0
    %311 = vmatprep.subr.mxu0 0.0
    %312 = vmatpush1.msra.mxu0 0.0
    %313 = vmatprep.subr.mxu0 0.0
    %314 = vmatpush1.msra.mxu0 0.0
    %315 = vmatprep.subr.mxu0 0.0
    %316 = vmatpush1.msra.mxu0 0.0
    %317 = vmatprep.subr.mxu0 0.0
    %318 = vmatpush1.msra.mxu0 0.0
    %319 = vmatprep.subr.mxu0 0.0
    %320 = vmatpush1.msra.mxu0 0.0
    %321 = vmatprep.subr.mxu0 0.0
    %322 = vmatpush1.msra.mxu0 0.0
    %323 = vmatprep.subr.mxu0 0.0
    %324 = vmatpush1.msra.mxu0 0.0
    %325 = vmatprep.subr.mxu0 0.0
    %326 = vmatpush1.msra.mxu0 0.0
    %327 = vmatprep.subr.mxu0 0.0
    %328 = vmatpush1.msra.mxu0 0.0
    %329 = vmatprep.subr.mxu0 0.0
    %330 = vmatpush1.msra.mxu0 0.0
    %331 = vmatprep.subr.mxu0 0.0
    %332 = vmatpush1.msra.mxu0 %v299
    %333 = vmatprep.subr.mxu0 0.0
    %334 = vmatpush2.msra.mxu0 0.0
    %335 = vmatprep.subr.mxu0 0.0
    %336 = vmatpush2.msra.mxu0 0.0
    %337 = vmatprep.subr.mxu0 0.0
    %338 = vmatpush2.msra.mxu0 0.0
    %339 = vmatprep.subr.mxu0 0.0
    %340 = vmatpush2.msra.mxu0 0.0
    %341 = vmatprep.subr.mxu0 0.0
    %342 = vmatpush2.msra.mxu0 0.0
    %343 = vmatprep.subr.mxu0 0.0
    %344 = vmatpush2.msra.mxu0 0.0
    %345 = vmatprep.subr.mxu0 0.0
    %346 = vmatpush2.msra.mxu0 0.0
    %347 = vmatprep.subr.mxu0 0.0
    %348 = vmatpush2.msra.mxu0 0.0
    %349 = vmatprep.subr.mxu0 0.0
    %350 = vmatpush2.msra.mxu0 0.0
    %351 = vmatprep.subr.mxu0 0.0
    %352 = vmatpush2.msra.mxu0 0.0
    %353 = vmatprep.subr.mxu0 0.0
    %354 = vmatpush2.msra.mxu0 0.0
    %355 = vmatprep.subr.mxu0 0.0
    %356 = vmatpush2.msra.mxu0 0.0
    %357 = vmatprep.subr.mxu0 0.0
    %358 = vmatpush2.msra.mxu0 0.0
    %359 = vmatprep.subr.mxu0 0.0
    %360 = vmatpush2.msra.mxu0 0.0
    %361 = vmatprep.subr.mxu0 0.0
    %362 = vmatpush2.msra.mxu0 0.0
    %363 = vmatprep.subr.mxu0 0.0
    %364 = vmatpush2.msra.mxu0 0.0
    %365 = vmatprep.mubr.f32.mxu0 0.0
    %366 = vmatmul.mubr.f32.gmra.mxu0 %v233
    %v367 = vpop.f32.mrf.mxu0
    %v368 = vadd.f32 0.0, %v367
    %v369 = vpop.f32.mrf.mxu0
    %370 = vmatprep.mubr.f32.mxu0 0.0
    %371 = vmatmul.mubr.f32.gmra.mxu0 %v235
    %v372 = vpop.f32.mrf.mxu0
    %v373 = vadd.f32 0.0, %v372
    %v374 = vpop.f32.mrf.mxu0
    %375 = vmatprep.mubr.f32.mxu0 0.0
    %376 = vmatmul.mubr.f32.gmra.mxu0 %v237
    %v377 = vpop.f32.mrf.mxu0
    %v378 = vadd.f32 0.0, %v377
    %v379 = vpop.f32.mrf.mxu0
    %380 = vmatprep.mubr.f32.mxu0 0.0
    %381 = vmatmul.mubr.f32.gmra.mxu0 %v239
    %v382 = vpop.f32.mrf.mxu0
    %v383 = vadd.f32 0.0, %v382
    %v384 = vpop.f32.mrf.mxu0
    %385 = vmatprep.mubr.f32.mxu0 0.0
    %386 = vmatmul.mubr.f32.gmra.mxu0 %v241
    %v387 = vpop.f32.mrf.mxu0
    %v388 = vadd.f32 0.0, %v387
    %v389 = vpop.f32.mrf.mxu0
    %390 = vmatprep.mubr.f32.mxu0 0.0
    %391 = vmatmul.mubr.f32.gmra.mxu0 %v243
    %v392 = vpop.f32.mrf.mxu0
    %v393 = vadd.f32 0.0, %v392
    %v394 = vpop.f32.mrf.mxu0
    %395 = vmatprep.mubr.f32.mxu0 0.0
    %396 = vmatmul.mubr.f32.gmra.mxu0 %v245
    %v397 = vpop.f32.mrf.mxu0
    %v398 = vadd.f32 0.0, %v397
    %v399 = vpop.f32.mrf.mxu0
    %400 = vmatprep.mubr.f32.mxu0 0.0
    %401 = vmatmul.mubr.f32.gmra.mxu0 %v247
    %v402 = vpop.f32.mrf.mxu0
    %v403 = vadd.f32 0.0, %v402
    %v404 = vpop.f32.mrf.mxu0
    %405 = vmatprep.mubr.f32.mxu0 0.0
    %406 = vmatmul.mubr.f32.gmra.mxu0 %v249
    %v407 = vpop.f32.mrf.mxu0
    %v408 = vadd.f32 0.0, %v407
    %v409 = vpop.f32.mrf.mxu0
    %410 = vmatprep.mubr.f32.mxu0 0.0
    %411 = vmatmul.mubr.f32.gmra.mxu0 %v251
    %v412 = vpop.f32.mrf.mxu0
    %v413 = vadd.f32 0.0, %v412
    %v414 = vpop.f32.mrf.mxu0
    %415 = vmatprep.mubr.f32.mxu0 0.0
    %416 = vmatmul.mubr.f32.gmra.mxu0 %v253
    %v417 = vpop.f32.mrf.mxu0
    %v418 = vadd.f32 0.0, %v417
    %v419 = vpop.f32.mrf.mxu0
    %420 = vmatprep.mubr.f32.mxu0 0.0
    %421 = vmatmul.mubr.f32.gmra.mxu0 %v255
    %v422 = vpop.f32.mrf.mxu0
    %v423 = vadd.f32 0.0, %v422
    %v424 = vpop.f32.mrf.mxu0
    %425 = vmatprep.mubr.f32.mxu0 0.0
    %426 = vmatmul.mubr.f32.gmra.mxu0 %v257
    %v427 = vpop.f32.mrf.mxu0
    %v428 = vadd.f32 0.0, %v427
    %v429 = vpop.f32.mrf.mxu0
    %430 = vmatprep.mubr.f32.mxu0 0.0
    %431 = vmatmul.mubr.f32.gmra.mxu0 %v259
    %v432 = vpop.f32.mrf.mxu0
    %v433 = vadd.f32 0.0, %v432
    %v434 = vpop.f32.mrf.mxu0
    %435 = vmatprep.mubr.f32.mxu0 0.0
    %436 = vmatmul.mubr.f32.gmra.mxu0 %v261
    %v437 = vpop.f32.mrf.mxu0
    %v438 = vadd.f32 0.0, %v437
    %v439 = vpop.f32.mrf.mxu0
    %440 = vmatprep.mubr.f32.mxu0 0.0
    %441 = vmatmul.mubr.f32.gmra.mxu0 %v263
    %v442 = vpop.f32.mrf.mxu0
    %v443 = vadd.f32 0.0, %v442
    %v444 = vpop.f32.mrf.mxu0
    %445 = vmatprep.mubr.f32.mxu0 0.0
    %446 = vmatmul.mubr.f32.gmra.mxu0 %v265
    %v447 = vpop.f32.mrf.mxu0
    %v448 = vadd.f32 0.0, %v447
    %v449 = vpop.f32.mrf.mxu0
    %450 = vmatprep.mubr.f32.mxu0 0.0
    %451 = vmatmul.mubr.f32.gmra.mxu0 %v267
    %v452 = vpop.f32.mrf.mxu0
    %v453 = vadd.f32 0.0, %v452
    %v454 = vpop.f32.mrf.mxu0
    %455 = vmatprep.mubr.f32.mxu0 0.0
    %456 = vmatmul.mubr.f32.gmra.mxu0 %v269
    %v457 = vpop.f32.mrf.mxu0
    %v458 = vadd.f32 0.0, %v457
    %v459 = vpop.f32.mrf.mxu0
    %460 = vmatprep.mubr.f32.mxu0 0.0
    %461 = vmatmul.mubr.f32.gmra.mxu0 %v271
    %v462 = vpop.f32.mrf.mxu0
    %v463 = vadd.f32 0.0, %v462
    %v464 = vpop.f32.mrf.mxu0
    %465 = vmatprep.mubr.f32.mxu0 0.0
    %466 = vmatmul.mubr.f32.gmra.mxu0 %v273
    %v467 = vpop.f32.mrf.mxu0
    %v468 = vadd.f32 0.0, %v467
    %v469 = vpop.f32.mrf.mxu0
    %470 = vmatprep.mubr.f32.mxu0 0.0
    %471 = vmatmul.mubr.f32.gmra.mxu0 %v275
    %v472 = vpop.f32.mrf.mxu0
    %v473 = vadd.f32 0.0, %v472
    %v474 = vpop.f32.mrf.mxu0
    %475 = vmatprep.mubr.f32.mxu0 0.0
    %476 = vmatmul.mubr.f32.gmra.mxu0 %v277
    %v477 = vpop.f32.mrf.mxu0
    %v478 = vadd.f32 0.0, %v477
    %v479 = vpop.f32.mrf.mxu0
    %480 = vmatprep.mubr.f32.mxu0 0.0
    %481 = vmatmul.mubr.f32.gmra.mxu0 %v279
    %v482 = vpop.f32.mrf.mxu0
    %v483 = vadd.f32 0.0, %v482
    %v484 = vpop.f32.mrf.mxu0
    %485 = vmatprep.mubr.f32.mxu0 0.0
    %486 = vmatmul.mubr.f32.gmra.mxu0 %v281
    %v487 = vpop.f32.mrf.mxu0
    %v488 = vadd.f32 0.0, %v487
    %v489 = vpop.f32.mrf.mxu0
    %490 = vmatprep.mubr.f32.mxu0 0.0
    %491 = vmatmul.mubr.f32.gmra.mxu0 %v283
    %v492 = vpop.f32.mrf.mxu0
    %v493 = vadd.f32 0.0, %v492
    %v494 = vpop.f32.mrf.mxu0
    %495 = vmatprep.mubr.f32.mxu0 0.0
    %496 = vmatmul.mubr.f32.gmra.mxu0 %v285
    %v497 = vpop.f32.mrf.mxu0
    %v498 = vadd.f32 0.0, %v497
    %v499 = vpop.f32.mrf.mxu0
    %500 = vmatprep.mubr.f32.mxu0 0.0
    %501 = vmatmul.mubr.f32.gmra.mxu0 %v287
    %v502 = vpop.f32.mrf.mxu0
    %v503 = vadd.f32 0.0, %v502
    %v504 = vpop.f32.mrf.mxu0
    %505 = vmatprep.mubr.f32.mxu0 0.0
    %506 = vmatmul.mubr.f32.gmra.mxu0 %v289
    %v507 = vpop.f32.mrf.mxu0
    %v508 = vadd.f32 0.0, %v507
    %v509 = vpop.f32.mrf.mxu0
    %510 = vmatprep.mubr.f32.mxu0 0.0
    %511 = vmatmul.mubr.f32.gmra.mxu0 %v291
    %v512 = vpop.f32.mrf.mxu0
    %v513 = vadd.f32 0.0, %v512
    %v514 = vpop.f32.mrf.mxu0
    %515 = vmatprep.mubr.f32.mxu0 0.0
    %516 = vmatmul.mubr.f32.gmra.mxu0 %v293
    %v517 = vpop.f32.mrf.mxu0
    %v518 = vadd.f32 0.0, %v517
    %v519 = vpop.f32.mrf.mxu0
    %520 = vmatprep.mubr.f32.mxu0 0.0
    %521 = vmatmul.mubr.f32.gmra.mxu0 %v295
    %v522 = vpop.f32.mrf.mxu0
    %v523 = vadd.f32 0.0, %v522
    %v524 = vpop.f32.mrf.mxu0
    %525 = vdwg.mxu0
    %v526 = vsel %vm232, %v18, 0
    %v528 = vsel %vm232, %v19, 0
    %v530 = vsel %vm232, %v23, 0
    %v532 = vsel %vm232, %v25, 0
    %v534 = vsel %vm232, %v27, 0
    %v536 = vsel %vm232, %v29, 0
    %v538 = vsel %vm232, %v31, 0
    %v540 = vsel %vm232, %v33, 0
    %v542 = vsel %vm232, %v35, 0
    %v544 = vsel %vm232, %v37, 0
    %v546 = vsel %vm232, %v39, 0
    %v548 = vsel %vm232, %v41, 0
    %v550 = vsel %vm232, %v43, 0
    %v552 = vsel %vm232, %v45, 0
    %v554 = vsel %vm232, %v47, 0
    %v556 = vsel %vm232, %v49, 0
    %v558 = vsel %vm232, %v51, 0
    %v560 = vsel %vm232, %v53, 0
    %v562 = vsel %vm232, %v55, 0
    %v564 = vsel %vm232, %v57, 0
    %v566 = vsel %vm232, %v59, 0
    %v568 = vsel %vm232, %v61, 0
    %v570 = vsel %vm232, %v63, 0
    %v572 = vsel %vm232, %v65, 0
    %v574 = vsel %vm232, %v67, 0
    %v576 = vsel %vm232, %v69, 0
    %v578 = vsel %vm232, %v71, 0
    %v580 = vsel %vm232, %v73, 0
    %v582 = vsel %vm232, %v75, 0
    %v584 = vsel %vm232, %v77, 0
    %v586 = vsel %vm232, %v79, 0
    %v588 = vsel %vm232, %v81, 0
    %v591 = vsel %vm297, %v82, 0
    %593 = vmatprep.subr.mxu0 0.0
    %594 = vmatpush1.msra.mxu0 0.0
    %595 = vmatprep.subr.mxu0 0.0
    %596 = vmatpush1.msra.mxu0 0.0
    %597 = vmatprep.subr.mxu0 0.0
    %598 = vmatpush1.msra.mxu0 0.0
    %599 = vmatprep.subr.mxu0 0.0
    %600 = vmatpush1.msra.mxu0 0.0
    %601 = vmatprep.subr.mxu0 0.0
    %602 = vmatpush1.msra.mxu0 0.0
    %603 = vmatprep.subr.mxu0 0.0
    %604 = vmatpush1.msra.mxu0 0.0
    %605 = vmatprep.subr.mxu0 0.0
    %606 = vmatpush1.msra.mxu0 0.0
    %607 = vmatprep.subr.mxu0 0.0
    %608 = vmatpush1.msra.mxu0 0.0
    %609 = vmatprep.subr.mxu0 0.0
    %610 = vmatpush1.msra.mxu0 0.0
    %611 = vmatprep.subr.mxu0 0.0
    %612 = vmatpush1.msra.mxu0 0.0
    %613 = vmatprep.subr.mxu0 0.0
    %614 = vmatpush1.msra.mxu0 0.0
    %615 = vmatprep.subr.mxu0 0.0
    %616 = vmatpush1.msra.mxu0 0.0
    %617 = vmatprep.subr.mxu0 0.0
    %618 = vmatpush1.msra.mxu0 0.0
    %619 = vmatprep.subr.mxu0 0.0
    %620 = vmatpush1.msra.mxu0 0.0
    %621 = vmatprep.subr.mxu0 0.0
    %622 = vmatpush1.msra.mxu0 0.0
    %623 = vmatprep.subr.mxu0 0.0
    %624 = vmatpush1.msra.mxu0 %v591
    %625 = vmatprep.subr.mxu0 0.0
    %626 = vmatpush2.msra.mxu0 0.0
    %627 = vmatprep.subr.mxu0 0.0
    %628 = vmatpush2.msra.mxu0 0.0
    %629 = vmatprep.subr.mxu0 0.0
    %630 = vmatpush2.msra.mxu0 0.0
    %631 = vmatprep.subr.mxu0 0.0
    %632 = vmatpush2.msra.mxu0 0.0
    %633 = vmatprep.subr.mxu0 0.0
    %634 = vmatpush2.msra.mxu0 0.0
    %635 = vmatprep.subr.mxu0 0.0
    %636 = vmatpush2.msra.mxu0 0.0
    %637 = vmatprep.subr.mxu0 0.0
    %638 = vmatpush2.msra.mxu0 0.0
    %639 = vmatprep.subr.mxu0 0.0
    %640 = vmatpush2.msra.mxu0 0.0
    %641 = vmatprep.subr.mxu0 0.0
    %642 = vmatpush2.msra.mxu0 0.0
    %643 = vmatprep.subr.mxu0 0.0
    %644 = vmatpush2.msra.mxu0 0.0
    %645 = vmatprep.subr.mxu0 0.0
    %646 = vmatpush2.msra.mxu0 0.0
    %647 = vmatprep.subr.mxu0 0.0
    %648 = vmatpush2.msra.mxu0 0.0
    %649 = vmatprep.subr.mxu0 0.0
    %650 = vmatpush2.msra.mxu0 0.0
    %651 = vmatprep.subr.mxu0 0.0
    %652 = vmatpush2.msra.mxu0 0.0
    %653 = vmatprep.subr.mxu0 0.0
    %654 = vmatpush2.msra.mxu0 0.0
    %655 = vmatprep.subr.mxu0 0.0
    %656 = vmatpush2.msra.mxu0 0.0
    %657 = vmatprep.mubr.f32.mxu0 0.0
    %658 = vmatmul.mubr.f32.gmra.mxu0 %v526
    %v659 = vpop.f32.mrf.mxu0
    %v660 = vadd.f32 %v368, %v659
    %v661 = vpop.f32.mrf.mxu0
    %662 = vmatprep.mubr.f32.mxu0 0.0
    %663 = vmatmul.mubr.f32.gmra.mxu0 %v528
    %v664 = vpop.f32.mrf.mxu0
    %v665 = vadd.f32 %v373, %v664
    %v666 = vpop.f32.mrf.mxu0
    %667 = vmatprep.mubr.f32.mxu0 0.0
    %668 = vmatmul.mubr.f32.gmra.mxu0 %v530
    %v669 = vpop.f32.mrf.mxu0
    %v670 = vadd.f32 %v378, %v669
    %v671 = vpop.f32.mrf.mxu0
    %672 = vmatprep.mubr.f32.mxu0 0.0
    %673 = vmatmul.mubr.f32.gmra.mxu0 %v532
    %v674 = vpop.f32.mrf.mxu0
    %v675 = vadd.f32 %v383, %v674
    %v676 = vpop.f32.mrf.mxu0
    %677 = vmatprep.mubr.f32.mxu0 0.0
    %678 = vmatmul.mubr.f32.gmra.mxu0 %v534
    %v679 = vpop.f32.mrf.mxu0
    %v680 = vadd.f32 %v388, %v679
    %v681 = vpop.f32.mrf.mxu0
    %682 = vmatprep.mubr.f32.mxu0 0.0
    %683 = vmatmul.mubr.f32.gmra.mxu0 %v536
    %v684 = vpop.f32.mrf.mxu0
    %v685 = vadd.f32 %v393, %v684
    %v686 = vpop.f32.mrf.mxu0
    %687 = vmatprep.mubr.f32.mxu0 0.0
    %688 = vmatmul.mubr.f32.gmra.mxu0 %v538
    %v689 = vpop.f32.mrf.mxu0
    %v690 = vadd.f32 %v398, %v689
    %v691 = vpop.f32.mrf.mxu0
    %692 = vmatprep.mubr.f32.mxu0 0.0
    %693 = vmatmul.mubr.f32.gmra.mxu0 %v540
    %v694 = vpop.f32.mrf.mxu0
    %v695 = vadd.f32 %v403, %v694
    %v696 = vpop.f32.mrf.mxu0
    %697 = vmatprep.mubr.f32.mxu0 0.0
    %698 = vmatmul.mubr.f32.gmra.mxu0 %v542
    %v699 = vpop.f32.mrf.mxu0
    %v700 = vadd.f32 %v408, %v699
    %v701 = vpop.f32.mrf.mxu0
    %702 = vmatprep.mubr.f32.mxu0 0.0
    %703 = vmatmul.mubr.f32.gmra.mxu0 %v544
    %v704 = vpop.f32.mrf.mxu0
    %v705 = vadd.f32 %v413, %v704
    %v706 = vpop.f32.mrf.mxu0
    %707 = vmatprep.mubr.f32.mxu0 0.0
    %708 = vmatmul.mubr.f32.gmra.mxu0 %v546
    %v709 = vpop.f32.mrf.mxu0
    %v710 = vadd.f32 %v418, %v709
    %v711 = vpop.f32.mrf.mxu0
    %712 = vmatprep.mubr.f32.mxu0 0.0
    %713 = vmatmul.mubr.f32.gmra.mxu0 %v548
    %v714 = vpop.f32.mrf.mxu0
    %v715 = vadd.f32 %v423, %v714
    %v716 = vpop.f32.mrf.mxu0
    %717 = vmatprep.mubr.f32.mxu0 0.0
    %718 = vmatmul.mubr.f32.gmra.mxu0 %v550
    %v719 = vpop.f32.mrf.mxu0
    %v720 = vadd.f32 %v428, %v719
    %v721 = vpop.f32.mrf.mxu0
    %722 = vmatprep.mubr.f32.mxu0 0.0
    %723 = vmatmul.mubr.f32.gmra.mxu0 %v552
    %v724 = vpop.f32.mrf.mxu0
    %v725 = vadd.f32 %v433, %v724
    %v726 = vpop.f32.mrf.mxu0
    %727 = vmatprep.mubr.f32.mxu0 0.0
    %728 = vmatmul.mubr.f32.gmra.mxu0 %v554
    %v729 = vpop.f32.mrf.mxu0
    %v730 = vadd.f32 %v438, %v729
    %v731 = vpop.f32.mrf.mxu0
    %732 = vmatprep.mubr.f32.mxu0 0.0
    %733 = vmatmul.mubr.f32.gmra.mxu0 %v556
    %v734 = vpop.f32.mrf.mxu0
    %v735 = vadd.f32 %v443, %v734
    %v736 = vpop.f32.mrf.mxu0
    %737 = vmatprep.mubr.f32.mxu0 0.0
    %738 = vmatmul.mubr.f32.gmra.mxu0 %v558
    %v739 = vpop.f32.mrf.mxu0
    %v740 = vadd.f32 %v448, %v739
    %v741 = vpop.f32.mrf.mxu0
    %742 = vmatprep.mubr.f32.mxu0 0.0
    %743 = vmatmul.mubr.f32.gmra.mxu0 %v560
    %v744 = vpop.f32.mrf.mxu0
    %v745 = vadd.f32 %v453, %v744
    %v746 = vpop.f32.mrf.mxu0
    %747 = vmatprep.mubr.f32.mxu0 0.0
    %748 = vmatmul.mubr.f32.gmra.mxu0 %v562
    %v749 = vpop.f32.mrf.mxu0
    %v750 = vadd.f32 %v458, %v749
    %v751 = vpop.f32.mrf.mxu0
    %752 = vmatprep.mubr.f32.mxu0 0.0
    %753 = vmatmul.mubr.f32.gmra.mxu0 %v564
    %v754 = vpop.f32.mrf.mxu0
    %v755 = vadd.f32 %v463, %v754
    %v756 = vpop.f32.mrf.mxu0
    %757 = vmatprep.mubr.f32.mxu0 0.0
    %758 = vmatmul.mubr.f32.gmra.mxu0 %v566
    %v759 = vpop.f32.mrf.mxu0
    %v760 = vadd.f32 %v468, %v759
    %v761 = vpop.f32.mrf.mxu0
    %762 = vmatprep.mubr.f32.mxu0 0.0
    %763 = vmatmul.mubr.f32.gmra.mxu0 %v568
    %v764 = vpop.f32.mrf.mxu0
    %v765 = vadd.f32 %v473, %v764
    %v766 = vpop.f32.mrf.mxu0
    %767 = vmatprep.mubr.f32.mxu0 0.0
    %768 = vmatmul.mubr.f32.gmra.mxu0 %v570
    %v769 = vpop.f32.mrf.mxu0
    %v770 = vadd.f32 %v478, %v769
    %v771 = vpop.f32.mrf.mxu0
    %772 = vmatprep.mubr.f32.mxu0 0.0
    %773 = vmatmul.mubr.f32.gmra.mxu0 %v572
    %v774 = vpop.f32.mrf.mxu0
    %v775 = vadd.f32 %v483, %v774
    %v776 = vpop.f32.mrf.mxu0
    %777 = vmatprep.mubr.f32.mxu0 0.0
    %778 = vmatmul.mubr.f32.gmra.mxu0 %v574
    %v779 = vpop.f32.mrf.mxu0
    %v780 = vadd.f32 %v488, %v779
    %v781 = vpop.f32.mrf.mxu0
    %782 = vmatprep.mubr.f32.mxu0 0.0
    %783 = vmatmul.mubr.f32.gmra.mxu0 %v576
    %v784 = vpop.f32.mrf.mxu0
    %v785 = vadd.f32 %v493, %v784
    %v786 = vpop.f32.mrf.mxu0
    %787 = vmatprep.mubr.f32.mxu0 0.0
    %788 = vmatmul.mubr.f32.gmra.mxu0 %v578
    %v789 = vpop.f32.mrf.mxu0
    %v790 = vadd.f32 %v498, %v789
    %v791 = vpop.f32.mrf.mxu0
    %792 = vmatprep.mubr.f32.mxu0 0.0
    %793 = vmatmul.mubr.f32.gmra.mxu0 %v580
    %v794 = vpop.f32.mrf.mxu0
    %v795 = vadd.f32 %v503, %v794
    %v796 = vpop.f32.mrf.mxu0
    %797 = vmatprep.mubr.f32.mxu0 0.0
    %798 = vmatmul.mubr.f32.gmra.mxu0 %v582
    %v799 = vpop.f32.mrf.mxu0
    %v800 = vadd.f32 %v508, %v799
    %v801 = vpop.f32.mrf.mxu0
    %802 = vmatprep.mubr.f32.mxu0 0.0
    %803 = vmatmul.mubr.f32.gmra.mxu0 %v584
    %v804 = vpop.f32.mrf.mxu0
    %v805 = vadd.f32 %v513, %v804
    %v806 = vpop.f32.mrf.mxu0
    %807 = vmatprep.mubr.f32.mxu0 0.0
    %808 = vmatmul.mubr.f32.gmra.mxu0 %v586
    %v809 = vpop.f32.mrf.mxu0
    %v810 = vadd.f32 %v518, %v809
    %v811 = vpop.f32.mrf.mxu0
    %812 = vmatprep.mubr.f32.mxu0 0.0
    %813 = vmatmul.mubr.f32.gmra.mxu0 %v588
    %v814 = vpop.f32.mrf.mxu0
    %v815 = vadd.f32 %v523, %v814
    %v816 = vpop.f32.mrf.mxu0
    %817 = vdwg.mxu0
    %s818 = scalar_lea.vmem %s1, 32
    %v819 = vld [vmem:[%s818] sm:$0xff]
    %v820 = vld [vmem:[%s818 + $0x8] sm:$0xff]
    %v822 = vsel %vm86, %v819, 0
    %v825 = vsel %vm86, %v820, 0
    %827 = vmatprep.subr.mxu0 0.0
    %828 = vmatpush1.msra.mxu0 0.0
    %829 = vmatprep.subr.mxu0 0.0
    %830 = vmatpush1.msra.mxu0 0.0
    %831 = vmatprep.subr.mxu0 0.0
    %832 = vmatpush1.msra.mxu0 0.0
    %833 = vmatprep.subr.mxu0 0.0
    %834 = vmatpush1.msra.mxu0 0.0
    %835 = vmatprep.subr.mxu0 0.0
    %836 = vmatpush1.msra.mxu0 0.0
    %837 = vmatprep.subr.mxu0 0.0
    %838 = vmatpush1.msra.mxu0 0.0
    %839 = vmatprep.subr.mxu0 0.0
    %840 = vmatpush1.msra.mxu0 0.0
    %841 = vmatprep.subr.mxu0 0.0
    %842 = vmatpush1.msra.mxu0 0.0
    %843 = vmatprep.subr.mxu0 0.0
    %844 = vmatpush1.msra.mxu0 0.0
    %845 = vmatprep.subr.mxu0 0.0
    %846 = vmatpush1.msra.mxu0 0.0
    %847 = vmatprep.subr.mxu0 0.0
    %848 = vmatpush1.msra.mxu0 0.0
    %849 = vmatprep.subr.mxu0 0.0
    %850 = vmatpush1.msra.mxu0 0.0
    %851 = vmatprep.subr.mxu0 0.0
    %852 = vmatpush1.msra.mxu0 0.0
    %853 = vmatprep.subr.mxu0 0.0
    %854 = vmatpush1.msra.mxu0 0.0
    %855 = vmatprep.subr.mxu0 0.0
    %856 = vmatpush1.msra.mxu0 %v19
    %857 = vmatprep.subr.mxu0 0.0
    %858 = vmatpush1.msra.mxu0 %v18
    %859 = vmatprep.subr.mxu0 0.0
    %860 = vmatpush2.msra.mxu0 0.0
    %861 = vmatprep.subr.mxu0 0.0
    %862 = vmatpush2.msra.mxu0 0.0
    %863 = vmatprep.subr.mxu0 0.0
    %864 = vmatpush2.msra.mxu0 0.0
    %865 = vmatprep.subr.mxu0 0.0
    %866 = vmatpush2.msra.mxu0 0.0
    %867 = vmatprep.subr.mxu0 0.0
    %868 = vmatpush2.msra.mxu0 0.0
    %869 = vmatprep.subr.mxu0 0.0
    %870 = vmatpush2.msra.mxu0 0.0
    %871 = vmatprep.subr.mxu0 0.0
    %872 = vmatpush2.msra.mxu0 0.0
    %873 = vmatprep.subr.mxu0 0.0
    %874 = vmatpush2.msra.mxu0 0.0
    %875 = vmatprep.subr.mxu0 0.0
    %876 = vmatpush2.msra.mxu0 0.0
    %877 = vmatprep.subr.mxu0 0.0
    %878 = vmatpush2.msra.mxu0 0.0
    %879 = vmatprep.subr.mxu0 0.0
    %880 = vmatpush2.msra.mxu0 0.0
    %881 = vmatprep.subr.mxu0 0.0
    %882 = vmatpush2.msra.mxu0 0.0
    %883 = vmatprep.subr.mxu0 0.0
    %884 = vmatpush2.msra.mxu0 0.0
    %885 = vmatprep.subr.mxu0 0.0
    %886 = vmatpush2.msra.mxu0 0.0
    %887 = vmatprep.subr.mxu0 0.0
    %888 = vmatpush2.msra.mxu0 0.0
    %889 = vmatprep.subr.mxu0 0.0
    %890 = vmatpush2.msra.mxu0 0.0
    %891 = vmatprep.mubr.f32.mxu0 0.0
    %892 = vmatmul.mubr.f32.gmra.mxu0 %v822
    %v893 = vpop.f32.mrf.mxu0
    %v894 = vadd.f32 0.0, %v893
    %v895 = vpop.f32.mrf.mxu0
    %896 = vmatprep.mubr.f32.mxu0 0.0
    %897 = vmatmul.mubr.f32.gmra.mxu0 %v825
    %v898 = vpop.f32.mrf.mxu0
    %v899 = vadd.f32 0.0, %v898
    %v900 = vpop.f32.mrf.mxu0
    %901 = vdwg.mxu0
    %904 = vrot.lane.b32.xlu0 %v894, 124
    %v905 = vpop.permute.xlu0 %904
    %906 = vrot.lane.b32.xlu0 %v899, 124
    %v907 = vpop.permute.xlu0 %906
    %908 = vrot.lane.b32.xlu0 %v894, 120
    %v909 = vpop.permute.xlu0 %908
    %910 = vrot.lane.b32.xlu0 %v899, 120
    %v911 = vpop.permute.xlu0 %910
    %912 = vrot.lane.b32.xlu0 %v894, 116
    %v913 = vpop.permute.xlu0 %912
    %914 = vrot.lane.b32.xlu0 %v899, 116
    %v915 = vpop.permute.xlu0 %914
    %916 = vrot.lane.b32.xlu0 %v894, 112
    %v917 = vpop.permute.xlu0 %916
    %918 = vrot.lane.b32.xlu0 %v899, 112
    %v919 = vpop.permute.xlu0 %918
    %920 = vrot.lane.b32.xlu0 %v894, 108
    %v921 = vpop.permute.xlu0 %920
    %922 = vrot.lane.b32.xlu0 %v899, 108
    %v923 = vpop.permute.xlu0 %922
    %924 = vrot.lane.b32.xlu0 %v894, 104
    %v925 = vpop.permute.xlu0 %924
    %926 = vrot.lane.b32.xlu0 %v899, 104
    %v927 = vpop.permute.xlu0 %926
    %928 = vrot.lane.b32.xlu0 %v894, 100
    %v929 = vpop.permute.xlu0 %928
    %930 = vrot.lane.b32.xlu0 %v899, 100
    %v931 = vpop.permute.xlu0 %930
    %932 = vrot.lane.b32.xlu0 %v894, 96
    %v933 = vpop.permute.xlu0 %932
    %934 = vrot.lane.b32.xlu0 %v899, 96
    %v935 = vpop.permute.xlu0 %934
    %936 = vrot.lane.b32.xlu0 %v894, 92
    %v937 = vpop.permute.xlu0 %936
    %938 = vrot.lane.b32.xlu0 %v899, 92
    %v939 = vpop.permute.xlu0 %938
    %940 = vrot.lane.b32.xlu0 %v894, 88
    %v941 = vpop.permute.xlu0 %940
    %942 = vrot.lane.b32.xlu0 %v899, 88
    %v943 = vpop.permute.xlu0 %942
    %944 = vrot.lane.b32.xlu0 %v894, 84
    %v945 = vpop.permute.xlu0 %944
    %946 = vrot.lane.b32.xlu0 %v899, 84
    %v947 = vpop.permute.xlu0 %946
    %948 = vrot.lane.b32.xlu0 %v894, 80
    %v949 = vpop.permute.xlu0 %948
    %950 = vrot.lane.b32.xlu0 %v899, 80
    %v951 = vpop.permute.xlu0 %950
    %952 = vrot.lane.b32.xlu0 %v894, 76
    %v953 = vpop.permute.xlu0 %952
    %954 = vrot.lane.b32.xlu0 %v899, 76
    %v955 = vpop.permute.xlu0 %954
    %956 = vrot.lane.b32.xlu0 %v894, 72
    %v957 = vpop.permute.xlu0 %956
    %958 = vrot.lane.b32.xlu0 %v899, 72
    %v959 = vpop.permute.xlu0 %958
    %960 = vrot.lane.b32.xlu0 %v894, 68
    %v961 = vpop.permute.xlu0 %960
    %962 = vrot.lane.b32.xlu0 %v899, 68
    %v963 = vpop.permute.xlu0 %962
    %s964 = scalar_lea.vmem %s2, 8
    %v965 = vld [vmem:[%s964] sm:$0xf]
    %v966 = vsel %vm232, %v894, 0
    %v968 = vsel %vm232, %v899, 0
    %v970 = vsel %vm232, %v905, 0
    %v972 = vsel %vm232, %v907, 0
    %v974 = vsel %vm232, %v909, 0
    %v976 = vsel %vm232, %v911, 0
    %v978 = vsel %vm232, %v913, 0
    %v980 = vsel %vm232, %v915, 0
    %v982 = vsel %vm232, %v917, 0
    %v984 = vsel %vm232, %v919, 0
    %v986 = vsel %vm232, %v921, 0
    %v988 = vsel %vm232, %v923, 0
    %v990 = vsel %vm232, %v925, 0
    %v992 = vsel %vm232, %v927, 0
    %v994 = vsel %vm232, %v929, 0
    %v996 = vsel %vm232, %v931, 0
    %v998 = vsel %vm232, %v933, 0
    %v1000 = vsel %vm232, %v935, 0
    %v1002 = vsel %vm232, %v937, 0
    %v1004 = vsel %vm232, %v939, 0
    %v1006 = vsel %vm232, %v941, 0
    %v1008 = vsel %vm232, %v943, 0
    %v1010 = vsel %vm232, %v945, 0
    %v1012 = vsel %vm232, %v947, 0
    %v1014 = vsel %vm232, %v949, 0
    %v1016 = vsel %vm232, %v951, 0
    %v1018 = vsel %vm232, %v953, 0
    %v1020 = vsel %vm232, %v955, 0
    %v1022 = vsel %vm232, %v957, 0
    %v1024 = vsel %vm232, %v959, 0
    %v1026 = vsel %vm232, %v961, 0
    %v1028 = vsel %vm232, %v963, 0
    %v1031 = vsel %vm297, %v965, 0
    %1033 = vmatprep.subr.mxu0 0.0
    %1034 = vmatpush1.msra.mxu0 0.0
    %1035 = vmatprep.subr.mxu0 0.0
    %1036 = vmatpush1.msra.mxu0 0.0
    %1037 = vmatprep.subr.mxu0 0.0
    %1038 = vmatpush1.msra.mxu0 0.0
    %1039 = vmatprep.subr.mxu0 0.0
    %1040 = vmatpush1.msra.mxu0 0.0
    %1041 = vmatprep.subr.mxu0 0.0
    %1042 = vmatpush1.msra.mxu0 0.0
    %1043 = vmatprep.subr.mxu0 0.0
    %1044 = vmatpush1.msra.mxu0 0.0
    %1045 = vmatprep.subr.mxu0 0.0
    %1046 = vmatpush1.msra.mxu0 0.0
    %1047 = vmatprep.subr.mxu0 0.0
    %1048 = vmatpush1.msra.mxu0 0.0
    %1049 = vmatprep.subr.mxu0 0.0
    %1050 = vmatpush1.msra.mxu0 0.0
    %1051 = vmatprep.subr.mxu0 0.0
    %1052 = vmatpush1.msra.mxu0 0.0
    %1053 = vmatprep.subr.mxu0 0.0
    %1054 = vmatpush1.msra.mxu0 0.0
    %1055 = vmatprep.subr.mxu0 0.0
    %1056 = vmatpush1.msra.mxu0 0.0
    %1057 = vmatprep.subr.mxu0 0.0
    %1058 = vmatpush1.msra.mxu0 0.0
    %1059 = vmatprep.subr.mxu0 0.0
    %1060 = vmatpush1.msra.mxu0 0.0
    %1061 = vmatprep.subr.mxu0 0.0
    %1062 = vmatpush1.msra.mxu0 0.0
    %1063 = vmatprep.subr.mxu0 0.0
    %1064 = vmatpush1.msra.mxu0 %v1031
    %1065 = vmatprep.subr.mxu0 0.0
    %1066 = vmatpush2.msra.mxu0 0.0
    %1067 = vmatprep.subr.mxu0 0.0
    %1068 = vmatpush2.msra.mxu0 0.0
    %1069 = vmatprep.subr.mxu0 0.0
    %1070 = vmatpush2.msra.mxu0 0.0
    %1071 = vmatprep.subr.mxu0 0.0
    %1072 = vmatpush2.msra.mxu0 0.0
    %1073 = vmatprep.subr.mxu0 0.0
    %1074 = vmatpush2.msra.mxu0 0.0
    %1075 = vmatprep.subr.mxu0 0.0
    %1076 = vmatpush2.msra.mxu0 0.0
    %1077 = vmatprep.subr.mxu0 0.0
    %1078 = vmatpush2.msra.mxu0 0.0
    %1079 = vmatprep.subr.mxu0 0.0
    %1080 = vmatpush2.msra.mxu0 0.0
    %1081 = vmatprep.subr.mxu0 0.0
    %1082 = vmatpush2.msra.mxu0 0.0
    %1083 = vmatprep.subr.mxu0 0.0
    %1084 = vmatpush2.msra.mxu0 0.0
    %1085 = vmatprep.subr.mxu0 0.0
    %1086 = vmatpush2.msra.mxu0 0.0
    %1087 = vmatprep.subr.mxu0 0.0
    %1088 = vmatpush2.msra.mxu0 0.0
    %1089 = vmatprep.subr.mxu0 0.0
    %1090 = vmatpush2.msra.mxu0 0.0
    %1091 = vmatprep.subr.mxu0 0.0
    %1092 = vmatpush2.msra.mxu0 0.0
    %1093 = vmatprep.subr.mxu0 0.0
    %1094 = vmatpush2.msra.mxu0 0.0
    %1095 = vmatprep.subr.mxu0 0.0
    %1096 = vmatpush2.msra.mxu0 0.0
    %1097 = vmatprep.mubr.f32.mxu0 0.0
    %1098 = vmatmul.mubr.f32.gmra.mxu0 %v966
    %v1099 = vpop.f32.mrf.mxu0
    %v1100 = vadd.f32 0.0, %v1099
    %v1101 = vpop.f32.mrf.mxu0
    %1102 = vmatprep.mubr.f32.mxu0 0.0
    %1103 = vmatmul.mubr.f32.gmra.mxu0 %v968
    %v1104 = vpop.f32.mrf.mxu0
    %v1105 = vadd.f32 0.0, %v1104
    %v1106 = vpop.f32.mrf.mxu0
    %1107 = vmatprep.mubr.f32.mxu0 0.0
    %1108 = vmatmul.mubr.f32.gmra.mxu0 %v970
    %v1109 = vpop.f32.mrf.mxu0
    %v1110 = vadd.f32 0.0, %v1109
    %v1111 = vpop.f32.mrf.mxu0
    %1112 = vmatprep.mubr.f32.mxu0 0.0
    %1113 = vmatmul.mubr.f32.gmra.mxu0 %v972
    %v1114 = vpop.f32.mrf.mxu0
    %v1115 = vadd.f32 0.0, %v1114
    %v1116 = vpop.f32.mrf.mxu0
    %1117 = vmatprep.mubr.f32.mxu0 0.0
    %1118 = vmatmul.mubr.f32.gmra.mxu0 %v974
    %v1119 = vpop.f32.mrf.mxu0
    %v1120 = vadd.f32 0.0, %v1119
    %v1121 = vpop.f32.mrf.mxu0
    %1122 = vmatprep.mubr.f32.mxu0 0.0
    %1123 = vmatmul.mubr.f32.gmra.mxu0 %v976
    %v1124 = vpop.f32.mrf.mxu0
    %v1125 = vadd.f32 0.0, %v1124
    %v1126 = vpop.f32.mrf.mxu0
    %1127 = vmatprep.mubr.f32.mxu0 0.0
    %1128 = vmatmul.mubr.f32.gmra.mxu0 %v978
    %v1129 = vpop.f32.mrf.mxu0
    %v1130 = vadd.f32 0.0, %v1129
    %v1131 = vpop.f32.mrf.mxu0
    %1132 = vmatprep.mubr.f32.mxu0 0.0
    %1133 = vmatmul.mubr.f32.gmra.mxu0 %v980
    %v1134 = vpop.f32.mrf.mxu0
    %v1135 = vadd.f32 0.0, %v1134
    %v1136 = vpop.f32.mrf.mxu0
    %1137 = vmatprep.mubr.f32.mxu0 0.0
    %1138 = vmatmul.mubr.f32.gmra.mxu0 %v982
    %v1139 = vpop.f32.mrf.mxu0
    %v1140 = vadd.f32 0.0, %v1139
    %v1141 = vpop.f32.mrf.mxu0
    %1142 = vmatprep.mubr.f32.mxu0 0.0
    %1143 = vmatmul.mubr.f32.gmra.mxu0 %v984
    %v1144 = vpop.f32.mrf.mxu0
    %v1145 = vadd.f32 0.0, %v1144
    %v1146 = vpop.f32.mrf.mxu0
    %1147 = vmatprep.mubr.f32.mxu0 0.0
    %1148 = vmatmul.mubr.f32.gmra.mxu0 %v986
    %v1149 = vpop.f32.mrf.mxu0
    %v1150 = vadd.f32 0.0, %v1149
    %v1151 = vpop.f32.mrf.mxu0
    %1152 = vmatprep.mubr.f32.mxu0 0.0
    %1153 = vmatmul.mubr.f32.gmra.mxu0 %v988
    %v1154 = vpop.f32.mrf.mxu0
    %v1155 = vadd.f32 0.0, %v1154
    %v1156 = vpop.f32.mrf.mxu0
    %1157 = vmatprep.mubr.f32.mxu0 0.0
    %1158 = vmatmul.mubr.f32.gmra.mxu0 %v990
    %v1159 = vpop.f32.mrf.mxu0
    %v1160 = vadd.f32 0.0, %v1159
    %v1161 = vpop.f32.mrf.mxu0
    %1162 = vmatprep.mubr.f32.mxu0 0.0
    %1163 = vmatmul.mubr.f32.gmra.mxu0 %v992
    %v1164 = vpop.f32.mrf.mxu0
    %v1165 = vadd.f32 0.0, %v1164
    %v1166 = vpop.f32.mrf.mxu0
    %1167 = vmatprep.mubr.f32.mxu0 0.0
    %1168 = vmatmul.mubr.f32.gmra.mxu0 %v994
    %v1169 = vpop.f32.mrf.mxu0
    %v1170 = vadd.f32 0.0, %v1169
    %v1171 = vpop.f32.mrf.mxu0
    %1172 = vmatprep.mubr.f32.mxu0 0.0
    %1173 = vmatmul.mubr.f32.gmra.mxu0 %v996
    %v1174 = vpop.f32.mrf.mxu0
    %v1175 = vadd.f32 0.0, %v1174
    %v1176 = vpop.f32.mrf.mxu0
    %1177 = vmatprep.mubr.f32.mxu0 0.0
    %1178 = vmatmul.mubr.f32.gmra.mxu0 %v998
    %v1179 = vpop.f32.mrf.mxu0
    %v1180 = vadd.f32 0.0, %v1179
    %v1181 = vpop.f32.mrf.mxu0
    %1182 = vmatprep.mubr.f32.mxu0 0.0
    %1183 = vmatmul.mubr.f32.gmra.mxu0 %v1000
    %v1184 = vpop.f32.mrf.mxu0
    %v1185 = vadd.f32 0.0, %v1184
    %v1186 = vpop.f32.mrf.mxu0
    %1187 = vmatprep.mubr.f32.mxu0 0.0
    %1188 = vmatmul.mubr.f32.gmra.mxu0 %v1002
    %v1189 = vpop.f32.mrf.mxu0
    %v1190 = vadd.f32 0.0, %v1189
    %v1191 = vpop.f32.mrf.mxu0
    %1192 = vmatprep.mubr.f32.mxu0 0.0
    %1193 = vmatmul.mubr.f32.gmra.mxu0 %v1004
    %v1194 = vpop.f32.mrf.mxu0
    %v1195 = vadd.f32 0.0, %v1194
    %v1196 = vpop.f32.mrf.mxu0
    %1197 = vmatprep.mubr.f32.mxu0 0.0
    %1198 = vmatmul.mubr.f32.gmra.mxu0 %v1006
    %v1199 = vpop.f32.mrf.mxu0
    %v1200 = vadd.f32 0.0, %v1199
    %v1201 = vpop.f32.mrf.mxu0
    %1202 = vmatprep.mubr.f32.mxu0 0.0
    %1203 = vmatmul.mubr.f32.gmra.mxu0 %v1008
    %v1204 = vpop.f32.mrf.mxu0
    %v1205 = vadd.f32 0.0, %v1204
    %v1206 = vpop.f32.mrf.mxu0
    %1207 = vmatprep.mubr.f32.mxu0 0.0
    %1208 = vmatmul.mubr.f32.gmra.mxu0 %v1010
    %v1209 = vpop.f32.mrf.mxu0
    %v1210 = vadd.f32 0.0, %v1209
    %v1211 = vpop.f32.mrf.mxu0
    %1212 = vmatprep.mubr.f32.mxu0 0.0
    %1213 = vmatmul.mubr.f32.gmra.mxu0 %v1012
    %v1214 = vpop.f32.mrf.mxu0
    %v1215 = vadd.f32 0.0, %v1214
    %v1216 = vpop.f32.mrf.mxu0
    %1217 = vmatprep.mubr.f32.mxu0 0.0
    %1218 = vmatmul.mubr.f32.gmra.mxu0 %v1014
    %v1219 = vpop.f32.mrf.mxu0
    %v1220 = vadd.f32 0.0, %v1219
    %v1221 = vpop.f32.mrf.mxu0
    %1222 = vmatprep.mubr.f32.mxu0 0.0
    %1223 = vmatmul.mubr.f32.gmra.mxu0 %v1016
    %v1224 = vpop.f32.mrf.mxu0
    %v1225 = vadd.f32 0.0, %v1224
    %v1226 = vpop.f32.mrf.mxu0
    %1227 = vmatprep.mubr.f32.mxu0 0.0
    %1228 = vmatmul.mubr.f32.gmra.mxu0 %v1018
    %v1229 = vpop.f32.mrf.mxu0
    %v1230 = vadd.f32 0.0, %v1229
    %v1231 = vpop.f32.mrf.mxu0
    %1232 = vmatprep.mubr.f32.mxu0 0.0
    %1233 = vmatmul.mubr.f32.gmra.mxu0 %v1020
    %v1234 = vpop.f32.mrf.mxu0
    %v1235 = vadd.f32 0.0, %v1234
    %v1236 = vpop.f32.mrf.mxu0
    %1237 = vmatprep.mubr.f32.mxu0 0.0
    %1238 = vmatmul.mubr.f32.gmra.mxu0 %v1022
    %v1239 = vpop.f32.mrf.mxu0
    %v1240 = vadd.f32 0.0, %v1239
    %v1241 = vpop.f32.mrf.mxu0
    %1242 = vmatprep.mubr.f32.mxu0 0.0
    %1243 = vmatmul.mubr.f32.gmra.mxu0 %v1024
    %v1244 = vpop.f32.mrf.mxu0
    %v1245 = vadd.f32 0.0, %v1244
    %v1246 = vpop.f32.mrf.mxu0
    %1247 = vmatprep.mubr.f32.mxu0 0.0
    %1248 = vmatmul.mubr.f32.gmra.mxu0 %v1026
    %v1249 = vpop.f32.mrf.mxu0
    %v1250 = vadd.f32 0.0, %v1249
    %v1251 = vpop.f32.mrf.mxu0
    %1252 = vmatprep.mubr.f32.mxu0 0.0
    %1253 = vmatmul.mubr.f32.gmra.mxu0 %v1028
    %v1254 = vpop.f32.mrf.mxu0
    %v1255 = vadd.f32 0.0, %v1254
    %v1256 = vpop.f32.mrf.mxu0
    %1257 = vdwg.mxu0
    %v1258 = vadd.f32 %v660, %v1100
    %v1259 = vadd.f32 %v665, %v1105
    %v1260 = vadd.f32 %v670, %v1110
    %v1261 = vadd.f32 %v675, %v1115
    %v1262 = vadd.f32 %v680, %v1120
    %v1263 = vadd.f32 %v685, %v1125
    %v1264 = vadd.f32 %v690, %v1130
    %v1265 = vadd.f32 %v695, %v1135
    %v1266 = vadd.f32 %v700, %v1140
    %v1267 = vadd.f32 %v705, %v1145
    %v1268 = vadd.f32 %v710, %v1150
    %v1269 = vadd.f32 %v715, %v1155
    %v1270 = vadd.f32 %v720, %v1160
    %v1271 = vadd.f32 %v725, %v1165
    %v1272 = vadd.f32 %v730, %v1170
    %v1273 = vadd.f32 %v735, %v1175
    %v1274 = vadd.f32 %v740, %v1180
    %v1275 = vadd.f32 %v745, %v1185
    %v1276 = vadd.f32 %v750, %v1190
    %v1277 = vadd.f32 %v755, %v1195
    %v1278 = vadd.f32 %v760, %v1200
    %v1279 = vadd.f32 %v765, %v1205
    %v1280 = vadd.f32 %v770, %v1210
    %v1281 = vadd.f32 %v775, %v1215
    %v1282 = vadd.f32 %v780, %v1220
    %v1283 = vadd.f32 %v785, %v1225
    %v1284 = vadd.f32 %v790, %v1230
    %v1285 = vadd.f32 %v795, %v1235
    %v1286 = vadd.f32 %v800, %v1240
    %v1287 = vadd.f32 %v805, %v1245
    %v1288 = vadd.f32 %v810, %v1250
    %v1289 = vadd.f32 %v815, %v1255
    %v1290 = vld [vmem:[%s3] sm:$0x1]
    %v1292 = vlaneseq
    %v1293 = vshrl.u32 %v1292, 7
    %v1294 = vsub.s32 0, %v1293
    %v1295 = vrot.slane %v1290, %v1294
    %v1297 = vadd.f32 %v1258, %v1295
    %v1298 = vadd.f32 %v1259, %v1295
    %v1299 = vadd.f32 %v1260, %v1295
    %v1300 = vadd.f32 %v1261, %v1295
    %v1301 = vadd.f32 %v1262, %v1295
    %v1302 = vadd.f32 %v1263, %v1295
    %v1303 = vadd.f32 %v1264, %v1295
    %v1304 = vadd.f32 %v1265, %v1295
    %v1305 = vadd.f32 %v1266, %v1295
    %v1306 = vadd.f32 %v1267, %v1295
    %v1307 = vadd.f32 %v1268, %v1295
    %v1308 = vadd.f32 %v1269, %v1295
    %v1309 = vadd.f32 %v1270, %v1295
    %v1310 = vadd.f32 %v1271, %v1295
    %v1311 = vadd.f32 %v1272, %v1295
    %v1312 = vadd.f32 %v1273, %v1295
    %v1313 = vadd.f32 %v1274, %v1295
    %v1314 = vadd.f32 %v1275, %v1295
    %v1315 = vadd.f32 %v1276, %v1295
    %v1316 = vadd.f32 %v1277, %v1295
    %v1317 = vadd.f32 %v1278, %v1295
    %v1318 = vadd.f32 %v1279, %v1295
    %v1319 = vadd.f32 %v1280, %v1295
    %v1320 = vadd.f32 %v1281, %v1295
    %v1321 = vadd.f32 %v1282, %v1295
    %v1322 = vadd.f32 %v1283, %v1295
    %v1323 = vadd.f32 %v1284, %v1295
    %v1324 = vadd.f32 %v1285, %v1295
    %v1325 = vadd.f32 %v1286, %v1295
    %v1326 = vadd.f32 %v1287, %v1295
    %v1327 = vadd.f32 %v1288, %v1295
    %v1328 = vadd.f32 %v1289, %v1295
    %vm1329 = vcmask 261120
    %1330 = vst.msk [vmem:[#allocation2] sm:$0xff] %vm1329, %v1297
    %1331 = vst.msk [vmem:[#allocation2 + $0x8] sm:$0xff] %vm1329, %v1298
    %1332 = vst.msk [vmem:[#allocation2 + $0x10] sm:$0xff] %vm1329, %v1299
    %1333 = vst.msk [vmem:[#allocation2 + $0x18] sm:$0xff] %vm1329, %v1300
    %1334 = vst.msk [vmem:[#allocation2 + $0x20] sm:$0xff] %vm1329, %v1301
    %1335 = vst.msk [vmem:[#allocation2 + $0x28] sm:$0xff] %vm1329, %v1302
    %1336 = vst.msk [vmem:[#allocation2 + $0x30] sm:$0xff] %vm1329, %v1303
    %1337 = vst.msk [vmem:[#allocation2 + $0x38] sm:$0xff] %vm1329, %v1304
    %1338 = vst.msk [vmem:[#allocation2 + $0x40] sm:$0xff] %vm1329, %v1305
    %1339 = vst.msk [vmem:[#allocation2 + $0x48] sm:$0xff] %vm1329, %v1306
    %1340 = vst.msk [vmem:[#allocation2 + $0x50] sm:$0xff] %vm1329, %v1307
    %1341 = vst.msk [vmem:[#allocation2 + $0x58] sm:$0xff] %vm1329, %v1308
    %1342 = vst.msk [vmem:[#allocation2 + $0x60] sm:$0xff] %vm1329, %v1309
    %1343 = vst.msk [vmem:[#allocation2 + $0x68] sm:$0xff] %vm1329, %v1310
    %1344 = vst.msk [vmem:[#allocation2 + $0x70] sm:$0xff] %vm1329, %v1311
    %1345 = vst.msk [vmem:[#allocation2 + $0x78] sm:$0xff] %vm1329, %v1312
    %1346 = vst.msk [vmem:[#allocation2 + $0x80] sm:$0xff] %vm1329, %v1313
    %1347 = vst.msk [vmem:[#allocation2 + $0x88] sm:$0xff] %vm1329, %v1314
    %1348 = vst.msk [vmem:[#allocation2 + $0x90] sm:$0xff] %vm1329, %v1315
    %1349 = vst.msk [vmem:[#allocation2 + $0x98] sm:$0xff] %vm1329, %v1316
    %1350 = vst.msk [vmem:[#allocation2 + $0xa0] sm:$0xff] %vm1329, %v1317
    %1351 = vst.msk [vmem:[#allocation2 + $0xa8] sm:$0xff] %vm1329, %v1318
    %1352 = vst.msk [vmem:[#allocation2 + $0xb0] sm:$0xff] %vm1329, %v1319
    %1353 = vst.msk [vmem:[#allocation2 + $0xb8] sm:$0xff] %vm1329, %v1320
    %1354 = vst.msk [vmem:[#allocation2 + $0xc0] sm:$0xff] %vm1329, %v1321
    %1355 = vst.msk [vmem:[#allocation2 + $0xc8] sm:$0xff] %vm1329, %v1322
    %1356 = vst.msk [vmem:[#allocation2 + $0xd0] sm:$0xff] %vm1329, %v1323
    %1357 = vst.msk [vmem:[#allocation2 + $0xd8] sm:$0xff] %vm1329, %v1324
    %1358 = vst.msk [vmem:[#allocation2 + $0xe0] sm:$0xff] %vm1329, %v1325
    %1359 = vst.msk [vmem:[#allocation2 + $0xe8] sm:$0xff] %vm1329, %v1326
    %1360 = vst.msk [vmem:[#allocation2 + $0xf0] sm:$0xff] %vm1329, %v1327
    %1361 = vst.msk [vmem:[#allocation2 + $0xf8] sm:$0xff] %vm1329, %v1328
    // Predicated region
    $region18: #{cheb_graph_conv.1} parent=1 // pred_check
      _
    $region19: #{cheb_graph_conv.1} parent=1 // pred_check_branch
      %1363 = sbr.rel (0) target = $region21
    $region20: #{cheb_graph_conv.1} parent=1 // pred_region
      %s1365 = ssub.s32 4096, 4096
      %1366 = vsyncadd [#allocation3], %s1365
      %s1367 = sshll.u32 [#allocation2], 4
      %s1368 = int_to_ptr.vmem [resolvable:$true] %s1367
      %1373 = dma.vmem_to_hbm [thread:$0]  %s1368, 4096, %s4, [#allocation3], 128, 128, 8
    $region21: #{cheb_graph_conv.1} parent=1 // pred_fallthru
      _
    // Predicated region
    $region22: #{cheb_graph_conv.1} parent=1 // pred_check
      _
    $region23: #{cheb_graph_conv.1} parent=1 // pred_check_branch
      %1375 = sbr.rel (0) target = $region25
    $region24: #{cheb_graph_conv.1} parent=1 // pred_region
      %1376 = dma.done [#allocation3], 4096
    $region25: #{cheb_graph_conv.1} parent=1 // pred_fallthru
      _
    %1377 = vsyncpa [#allocation3], 1

</llo_original>
